<compile_context>
chip_gen: v7x
topology: tpu7x:2x2x1
jax: 0.10.0
libtpu: 0.0.40
codegen_flags: <defaults>
</compile_context>

<pallas_src>
import functools

import jax
import jax.numpy as jnp
from jax.experimental import pallas as pl
from jax.experimental.pallas import tpu as pltpu

BN_EPS = 1e-5
# Tile budget sized for v7x (64 MiB physical VMEM); v5e/v6e have 128 MiB so
# this is conservative there.
_VMEM_BUDGET = 40 * 1024 * 1024


def _round_up(x, m):
    return (x + m - 1) // m * m


def _pick_toh(oh, max_toh):
    """Largest divisor of OH that is <= max_toh (at least 1)."""
    # TODO(synk): allow non-divisor tiles via a cdiv grid + masked stats for
    #             awkward (e.g. prime) OH instead of collapsing toward toh=1.
    best = 1
    for cand in range(1, min(oh, max(1, max_toh)) + 1):
        if oh % cand == 0:
            best = cand
    return best


def _vmem_limit(block_bytes):
    """Scoped-VMEM limit derived from actual block footprint (v7x-safe cap)."""
    return int(min(max(2 * block_bytes + (4 << 20), 16 << 20), 56 << 20))


def _conv_stats_kernel(x_ref, w_ref, y_ref, stats_ref, acc_ref, *, k, dil, toh,
                       ow, kcp):
    # x_ref:     [HP, OW, k*Cin_pad]       bf16, kw/cin pre-folded, one image
    # w_ref:     [k, k*Cin_pad, Cout_pad]  bf16, resident across the grid
    # y_ref:     [toh*ow, Cout_pad]        bf16, conv tile (bias cancels under
    #                                      batch-stat BN)
    # stats_ref: [2, Cout_pad]             f32, row0 = sum, row1 = sum of sq.
    # acc_ref:   [toh*ow, Cout_pad]        f32 VMEM accumulator scratch
    ti = pl.program_id(1)
    oh0 = pl.multiple_of(ti * toh, toh)
    for kh in range(k):  # k dots, each contracting K = k*cin_pad on the MXU
        lhs = x_ref[pl.ds(oh0 + kh * dil, toh), :, :].reshape(toh * ow, kcp)
        part = jnp.dot(lhs, w_ref[kh], preferred_element_type=jnp.float32)
        if kh == 0:
            acc_ref[...] = part
        else:
            acc_ref[...] += part
    acc = acc_ref[...]
    y_ref[...] = acc.astype(y_ref.dtype)
    stats_ref[0:1, :] = jnp.sum(acc, axis=0, keepdims=True)
    stats_ref[1:2, :] = jnp.sum(acc * acc, axis=0, keepdims=True)


def _bn_relu_transpose_kernel(y_ref, scale_ref, shift_ref, o_ref):
    # y: [rows, Cout_pad] bf16; scale/shift: [1, Cout_pad] f32
    # o: [Cout_pad, rows] — channel-major so the wrapper NCHW reshape is free.
    z = y_ref[...].astype(jnp.float32) * scale_ref[...] + shift_ref[...]
    o_ref[...] = jnp.maximum(z, 0.0).T.astype(o_ref.dtype)


def _bn_relu_kernel(y_ref, scale_ref, shift_ref, o_ref):
    z = y_ref[...].astype(jnp.float32) * scale_ref[...] + shift_ref[...]
    o_ref[...] = jnp.maximum(z, 0.0).astype(o_ref.dtype)


@functools.partial(jax.jit, static_argnames=("k", "p", "dilation"))
def conv_bn_relu(x_nchw, weight, bias, gamma, beta, *, k, p, dilation):
    """Forward of Conv(in_c, out_c, k, p, dilation) for NCHW input.

    weight: [Cout, Cin, k, k] (PyTorch layout), bias/gamma/beta: [Cout].
    Returns NCHW output.  `bias` is accepted but unused: under training-mode
    BatchNorm the conv bias is exactly cancelled by the mean subtraction.
    """
    del bias
    n, cin, h, w_in = x_nchw.shape
    cout = weight.shape[0]
    d = dilation
    oh = h + 2 * p - d * (k - 1)
    ow = w_in + 2 * p - d * (k - 1)
    hp = h + 2 * p
    m = n * oh * ow
    out_dtype = x_nchw.dtype

    cin_pad = _round_up(cin, 8)
    # Fill the 256-wide MXU on v6e/v7x when cout > 128; 128 otherwise (v5e).
    cout_pad = 128 if cout <= 128 else _round_up(cout, 256)
    kcp = k * cin_pad

    # bf16 *before* the layout work (halves HBM traffic of transpose/pad),
    # NCHW -> NHWC, spatial + channel pad, then fold (kw, cin) into the minor
    # dim so each kernel dot contracts over k*cin_pad instead of cin_pad.
    x_bf = x_nchw.astype(jnp.bfloat16)
    x_nhwc = jnp.transpose(x_bf, (0, 2, 3, 1))
    x_p = jnp.pad(x_nhwc, ((0, 0), (p, p), (p, p), (0, cin_pad - cin)))
    xk = jnp.concatenate(
        [x_p[:, :, kw * d:kw * d + ow, :] for kw in range(k)], axis=-1)
    # xk: [N, HP, OW, k*Cin_pad]

    # [Cout,Cin,kh,kw] -> [kh,kw,Cin_pad,Cout_pad] -> [k, k*Cin_pad, Cout_pad]
    w4 = jnp.transpose(weight, (2, 3, 1, 0)).astype(jnp.float32)
    w4 = jnp.pad(w4, ((0, 0), (0, 0), (0, cin_pad - cin), (0, cout_pad - cout)))
    w3 = w4.reshape(k, kcp, cout_pad).astype(jnp.bfloat16)

    # Budget-aware OH tile: image + weights (double-buffered) are fixed; the
    # f32 accumulator and the (double-buffered) bf16 y tile scale with toh.
    fixed_vmem = 2 * (hp * ow * kcp * 2) + 2 * (k * kcp * cout_pad * 2)
    per_row = ow * (cout_pad * 8 + kcp * 4)
    toh = _pick_toh(oh, (_VMEM_BUDGET - fixed_vmem) // per_row)
    oh_tiles = oh // toh
    rows = toh * ow

    flops = 2 * m * (k * k * cin_pad) * cout_pad
    p1_bytes = (xk.size * 2 + w3.size * 2 + m * cout_pad * 2
                + n * oh_tiles * 2 * cout_pad * 4)
    kern = functools.partial(_conv_stats_kernel, k=k, dil=d, toh=toh, ow=ow,
                             kcp=kcp)

    # ---- Phase 1: conv (kw/cin-folded MXU contraction) + BN partials ----
    y, stats = pl.pallas_call(
        kern,
        grid=(n, oh_tiles),
        in_specs=[
            pl.BlockSpec((None, hp, ow, kcp), lambda ni, ti: (ni, 0, 0, 0)),
            pl.BlockSpec((k, kcp, cout_pad), lambda ni, ti: (0, 0, 0)),
        ],
        out_specs=[
            pl.BlockSpec((None, rows, cout_pad),
                         lambda ni, ti: (ni * oh_tiles + ti, 0, 0)),
            pl.BlockSpec((None, 2, cout_pad),
                         lambda ni, ti: (ni * oh_tiles + ti, 0, 0)),
        ],
        out_shape=[
            jax.ShapeDtypeStruct((n * oh_tiles, rows, cout_pad), jnp.bfloat16),
            jax.ShapeDtypeStruct((n * oh_tiles, 2, cout_pad), jnp.float32),
        ],
        scratch_shapes=[pltpu.VMEM((rows, cout_pad), jnp.float32)],
        compiler_params=pltpu.CompilerParams(
            dimension_semantics=("parallel", "parallel"),
            vmem_limit_bytes=_vmem_limit(fixed_vmem + rows * cout_pad * 8)),
        cost_estimate=pl.CostEstimate(flops=flops, transcendentals=0,
                                      bytes_accessed=int(p1_bytes)),
    )(xk, w3)

    # ---- Tiny reduction: BN scale/shift per channel (training-mode stats) ----
    col_sum = jnp.sum(stats[:, 0, :], axis=0)                 # [Cout_pad]
    col_sq = jnp.sum(stats[:, 1, :], axis=0)
    mean = col_sum / m
    # NOTE: E[x^2] - E[x]^2 in f32 (biased, as PyTorch); adequate at these
    # activation scales — see review concern about catastrophic cancellation.
    var = jnp.maximum(col_sq / m - mean * mean, 0.0)
    gamma_p = jnp.pad(gamma.astype(jnp.float32), (0, cout_pad - cout))
    beta_p = jnp.pad(beta.astype(jnp.float32), (0, cout_pad - cout))
    scale_v = gamma_p * jax.lax.rsqrt(var + BN_EPS)
    shift_v = beta_p - mean * scale_v
    scale = scale_v.reshape(1, cout_pad)
    shift = shift_v.reshape(1, cout_pad)

    # ---- Phase 2: FMA + ReLU (+ fused on-chip transpose to channel-major) ----
    out_isz = jnp.dtype(out_dtype).itemsize
    p2_block = rows * cout_pad * (2 * 2 + 2 * out_isz + 4)
    p2_params = pltpu.CompilerParams(
        dimension_semantics=("parallel", "parallel"),
        vmem_limit_bytes=_vmem_limit(p2_block))
    p2_cost = pl.CostEstimate(
        flops=2 * m * cout_pad, transcendentals=0,
        bytes_accessed=int(m * cout_pad * (2 + out_isz) + 2 * cout_pad * 4))
    y_spec = pl.BlockSpec((None, rows, cout_pad),
                          lambda ni, ti: (ni * oh_tiles + ti, 0, 0))
    vec_spec = pl.BlockSpec((1, cout_pad), lambda ni, ti: (0, 0))

    if rows % 128 == 0:
        out_p2 = pl.pallas_call(
            _bn_relu_transpose_kernel,
            grid=(n, oh_tiles),
            in_specs=[y_spec, vec_spec, vec_spec],
            out_specs=pl.BlockSpec((None, None, cout_pad, rows),
                                   lambda ni, ti: (ni, ti, 0, 0)),
            out_shape=jax.ShapeDtypeStruct((n, oh_tiles, cout_pad, rows),
                                           out_dtype),
            compiler_params=p2_params, cost_estimate=p2_cost,
        )(y, scale, shift)
        out5 = out_p2[:, :, :cout, :].reshape(n, oh_tiles, cout, toh, ow)
        # With oh_tiles == 1 (typical here) this transpose is a no-op for XLA.
        out = jnp.transpose(out5, (0, 2, 1, 3, 4)).reshape(n, cout, oh, ow)
    else:
        # Tile width not transpose-friendly: keep NHWC order and let XLA do
        # the final layout change on the channel-sliced result.
        out_p2 = pl.pallas_call(
            _bn_relu_kernel,
            grid=(n, oh_tiles),
            in_specs=[y_spec, vec_spec, vec_spec],
            out_specs=pl.BlockSpec((None, rows, cout_pad),
                                   lambda ni, ti: (ni * oh_tiles + ti, 0, 0)),
            out_shape=jax.ShapeDtypeStruct((n * oh_tiles, rows, cout_pad),
                                           out_dtype),
            compiler_params=p2_params, cost_estimate=p2_cost,
        )(y, scale, shift)
        out5 = out_p2[:, :, :cout].reshape(n, oh_tiles, toh, ow, cout)
        out = jnp.transpose(out5, (0, 4, 1, 2, 3)).reshape(n, cout, oh, ow)

    return out


def _reference(x_nchw, weight, bias, gamma, beta, *, k, p, dilation):
    """Pure-JAX reference (lax conv + batch-stat BN + ReLU)."""
    y = jax.lax.conv_general_dilated(
        x_nchw.astype(jnp.float32), weight.astype(jnp.float32),
        window_strides=(1, 1), padding=[(p, p), (p, p)],
        rhs_dilation=(dilation, dilation),
        dimension_numbers=("NCHW", "OIHW", "NCHW"))
    y = y + bias.reshape(1, -1, 1, 1)
    mean = jnp.mean(y, axis=(0, 2, 3), keepdims=True)
    var = jnp.mean((y - mean) ** 2, axis=(0, 2, 3), keepdims=True)
    y = (y - mean) * jax.lax.rsqrt(var + BN_EPS)
    y = y * gamma.reshape(1, -1, 1, 1) + beta.reshape(1, -1, 1, 1)
    return jnp.maximum(y, 0.0)


if __name__ == "__main__":
    # Small, deterministic problem: N=2, Cin=4, H=W=16, Cout=8, k=3, p=1.
    N, CIN, H, W = 2, 4, 16, 16
    COUT, K, P, DIL = 8, 3, 1, 1

    key = jax.random.PRNGKey(0)
    kx, kw, kb, kg, kbe = jax.random.split(key, 5)
    x = jax.random.normal(kx, (N, CIN, H, W), dtype=jnp.float32)
    weight = jax.random.normal(kw, (COUT, CIN, K, K), dtype=jnp.float32) * 0.1
    bias = jax.random.normal(kb, (COUT,), dtype=jnp.float32) * 0.1
    gamma = 1.0 + 0.1 * jax.random.normal(kg, (COUT,), dtype=jnp.float32)
    beta = 0.1 * jax.random.normal(kbe, (COUT,), dtype=jnp.float32)

    out = conv_bn_relu(x, weight, bias, gamma, beta, k=K, p=P, dilation=DIL)
    out = jax.block_until_ready(out)

    ref = _reference(x, weight, bias, gamma, beta, k=K, p=P, dilation=DIL)
    assert out.shape == (N, COUT, H, W), out.shape
    assert jnp.allclose(out, ref, rtol=2e-2, atol=2e-2), float(
        jnp.max(jnp.abs(out - ref)))

    print("KERNEL_OK")
</pallas_src>

<mosaic_0001>
module attributes {stable_mosaic.version = 11 : i64} {
  func.func @_conv_stats_kernel(%arg0: i32, %arg1: i32, %arg2: memref<1x18x16x24xbf16, #tpu.memory_space<vmem>>, %arg3: memref<3x24x128xbf16, #tpu.memory_space<vmem>>, %arg4: memref<1x256x128xbf16, #tpu.memory_space<vmem>>, %arg5: memref<1x2x128xf32, #tpu.memory_space<vmem>>, %arg6: memref<256x128xf32, #tpu.memory_space<vmem>>) attributes {dimension_semantics = [#tpu.dimension_semantics<parallel>, #tpu.dimension_semantics<parallel>], iteration_bounds = array<i64: 2, 1>, scalar_prefetch = 0 : i64, scratch_operands = 1 : i64, tpu.core_type = #tpu.core_type<tc>, window_params = [{transform_indices = @transform_0, window_bounds = array<i64: 1, 18, 16, 24>}, {pipeline_mode = #tpu.pipeline_mode<synchronous>, transform_indices = @transform_1, window_bounds = array<i64: 3, 24, 128>}, {transform_indices = @transform_2, window_bounds = array<i64: 1, 256, 128>}, {transform_indices = @transform_3, window_bounds = array<i64: 1, 2, 128>}]} {
    %c16_i32 = arith.constant 16 : i32
    %0 = arith.muli %arg1, %c16_i32 : i32
    %1 = tpu.assume_multiple %0, 16 : i32
    %c0_i32 = arith.constant 0 : i32
    %2 = arith.addi %1, %c0_i32 : i32
    %c0 = arith.constant 0 : index
    %3 = arith.index_cast %2 : i32 to index
    %c0_0 = arith.constant 0 : index
    %c0_1 = arith.constant 0 : index
    %4 = vector.load %arg2[%c0, %3, %c0_0, %c0_1] : memref<1x18x16x24xbf16, #tpu.memory_space<vmem>>, vector<1x16x16x24xbf16>
    %5 = vector.shape_cast %4 : vector<1x16x16x24xbf16> to vector<16x16x24xbf16>
    %6 = vector.shape_cast %5 : vector<16x16x24xbf16> to vector<256x24xbf16>
    %c0_2 = arith.constant 0 : index
    %c0_3 = arith.constant 0 : index
    %c0_4 = arith.constant 0 : index
    %7 = vector.load %arg3[%c0_2, %c0_3, %c0_4] : memref<3x24x128xbf16, #tpu.memory_space<vmem>>, vector<1x24x128xbf16>
    %8 = vector.shape_cast %7 : vector<1x24x128xbf16> to vector<24x128xbf16>
    %cst = arith.constant dense<0.000000e+00> : vector<256x128xf32>
    %9 = tpu.matmul %6, %8, %cst {dimension_numbers = #tpu.dot_dimension_numbers<[1], [0], [0], [1], [0, 0, 1, 1], [], []>} : vector<256x24xbf16>, vector<24x128xbf16>, vector<256x128xf32> -> vector<256x128xf32>
    %c0_5 = arith.constant 0 : index
    %c0_6 = arith.constant 0 : index
    %10 = vector.load %arg6[%c0_5, %c0_6] : memref<256x128xf32, #tpu.memory_space<vmem>>, vector<256x128xf32>
    tpu.vector_store %arg6[%c0_5, %c0_6], %9 {strides = array<i32>} : memref<256x128xf32, #tpu.memory_space<vmem>>, vector<256x128xf32>,
    %c1_i32 = arith.constant 1 : i32
    %11 = arith.addi %1, %c1_i32 : i32
    %c0_7 = arith.constant 0 : index
    %12 = arith.index_cast %11 : i32 to index
    %c0_8 = arith.constant 0 : index
    %c0_9 = arith.constant 0 : index
    %13 = vector.load %arg2[%c0_7, %12, %c0_8, %c0_9] : memref<1x18x16x24xbf16, #tpu.memory_space<vmem>>, vector<1x16x16x24xbf16>
    %14 = vector.shape_cast %13 : vector<1x16x16x24xbf16> to vector<16x16x24xbf16>
    %15 = vector.shape_cast %14 : vector<16x16x24xbf16> to vector<256x24xbf16>
    %c1 = arith.constant 1 : index
    %c0_10 = arith.constant 0 : index
    %c0_11 = arith.constant 0 : index
    %16 = vector.load %arg3[%c1, %c0_10, %c0_11] : memref<3x24x128xbf16, #tpu.memory_space<vmem>>, vector<1x24x128xbf16>
    %17 = vector.shape_cast %16 : vector<1x24x128xbf16> to vector<24x128xbf16>
    %cst_12 = arith.constant dense<0.000000e+00> : vector<256x128xf32>
    %18 = tpu.matmul %15, %17, %cst_12 {dimension_numbers = #tpu.dot_dimension_numbers<[1], [0], [0], [1], [0, 0, 1, 1], [], []>} : vector<256x24xbf16>, vector<24x128xbf16>, vector<256x128xf32> -> vector<256x128xf32>
    %c0_13 = arith.constant 0 : index
    %c0_14 = arith.constant 0 : index
    %19 = vector.load %arg6[%c0_13, %c0_14] : memref<256x128xf32, #tpu.memory_space<vmem>>, vector<256x128xf32>
    %20 = arith.addf %19, %18 : vector<256x128xf32>
    %c0_15 = arith.constant 0 : index
    %c0_16 = arith.constant 0 : index
    %21 = vector.load %arg6[%c0_15, %c0_16] : memref<256x128xf32, #tpu.memory_space<vmem>>, vector<256x128xf32>
    tpu.vector_store %arg6[%c0_15, %c0_16], %20 {strides = array<i32>} : memref<256x128xf32, #tpu.memory_space<vmem>>, vector<256x128xf32>,
    %c2_i32 = arith.constant 2 : i32
    %22 = arith.addi %1, %c2_i32 : i32
    %c0_17 = arith.constant 0 : index
    %23 = arith.index_cast %22 : i32 to index
    %c0_18 = arith.constant 0 : index
    %c0_19 = arith.constant 0 : index
    %24 = vector.load %arg2[%c0_17, %23, %c0_18, %c0_19] : memref<1x18x16x24xbf16, #tpu.memory_space<vmem>>, vector<1x16x16x24xbf16>
    %25 = vector.shape_cast %24 : vector<1x16x16x24xbf16> to vector<16x16x24xbf16>
    %26 = vector.shape_cast %25 : vector<16x16x24xbf16> to vector<256x24xbf16>
    %c2 = arith.constant 2 : index
    %c0_20 = arith.constant 0 : index
    %c0_21 = arith.constant 0 : index
    %27 = vector.load %arg3[%c2, %c0_20, %c0_21] : memref<3x24x128xbf16, #tpu.memory_space<vmem>>, vector<1x24x128xbf16>
    %28 = vector.shape_cast %27 : vector<1x24x128xbf16> to vector<24x128xbf16>
    %cst_22 = arith.constant dense<0.000000e+00> : vector<256x128xf32>
    %29 = tpu.matmul %26, %28, %cst_22 {dimension_numbers = #tpu.dot_dimension_numbers<[1], [0], [0], [1], [0, 0, 1, 1], [], []>} : vector<256x24xbf16>, vector<24x128xbf16>, vector<256x128xf32> -> vector<256x128xf32>
    %c0_23 = arith.constant 0 : index
    %c0_24 = arith.constant 0 : index
    %30 = vector.load %arg6[%c0_23, %c0_24] : memref<256x128xf32, #tpu.memory_space<vmem>>, vector<256x128xf32>
    %31 = arith.addf %30, %29 : vector<256x128xf32>
    %c0_25 = arith.constant 0 : index
    %c0_26 = arith.constant 0 : index
    %32 = vector.load %arg6[%c0_25, %c0_26] : memref<256x128xf32, #tpu.memory_space<vmem>>, vector<256x128xf32>
    tpu.vector_store %arg6[%c0_25, %c0_26], %31 {strides = array<i32>} : memref<256x128xf32, #tpu.memory_space<vmem>>, vector<256x128xf32>,
    %c0_27 = arith.constant 0 : index
    %c0_28 = arith.constant 0 : index
    %33 = vector.load %arg6[%c0_27, %c0_28] : memref<256x128xf32, #tpu.memory_space<vmem>>, vector<256x128xf32>
    %34 = arith.truncf %33 : vector<256x128xf32> to vector<256x128xbf16>
    %c0_29 = arith.constant 0 : index
    %c0_30 = arith.constant 0 : index
    %c0_31 = arith.constant 0 : index
    %35 = vector.load %arg4[%c0_29, %c0_30, %c0_31] : memref<1x256x128xbf16, #tpu.memory_space<vmem>>, vector<1x256x128xbf16>
    %36 = vector.shape_cast %35 : vector<1x256x128xbf16> to vector<256x128xbf16>
    %37 = vector.shape_cast %34 : vector<256x128xbf16> to vector<1x256x128xbf16>
    tpu.vector_store %arg4[%c0_29, %c0_30, %c0_31], %37 {strides = array<i32>} : memref<1x256x128xbf16, #tpu.memory_space<vmem>>, vector<1x256x128xbf16>,
    %cst_32 = arith.constant dense<0.000000e+00> : vector<128xf32>
    %38 = vector.multi_reduction <add>, %33, %cst_32 [0] : vector<256x128xf32> to vector<128xf32>
    %39 = vector.shape_cast %38 : vector<128xf32> to vector<1x128xf32>
    %c0_33 = arith.constant 0 : index
    %c0_34 = arith.constant 0 : index
    %c0_35 = arith.constant 0 : index
    %40 = vector.load %arg5[%c0_33, %c0_34, %c0_35] : memref<1x2x128xf32, #tpu.memory_space<vmem>>, vector<1x1x128xf32>
    %41 = vector.shape_cast %40 : vector<1x1x128xf32> to vector<1x128xf32>
    %42 = vector.shape_cast %39 : vector<1x128xf32> to vector<1x1x128xf32>
    tpu.vector_store %arg5[%c0_33, %c0_34, %c0_35], %42 {strides = array<i32>} : memref<1x2x128xf32, #tpu.memory_space<vmem>>, vector<1x1x128xf32>,
    %43 = arith.mulf %33, %33 : vector<256x128xf32>
    %cst_36 = arith.constant dense<0.000000e+00> : vector<128xf32>
    %44 = vector.multi_reduction <add>, %43, %cst_36 [0] : vector<256x128xf32> to vector<128xf32>
    %45 = vector.shape_cast %44 : vector<128xf32> to vector<1x128xf32>
    %c0_37 = arith.constant 0 : index
    %c1_38 = arith.constant 1 : index
    %c0_39 = arith.constant 0 : index
    %46 = vector.load %arg5[%c0_37, %c1_38, %c0_39] : memref<1x2x128xf32, #tpu.memory_space<vmem>>, vector<1x1x128xf32>
    %47 = vector.shape_cast %46 : vector<1x1x128xf32> to vector<1x128xf32>
    %48 = vector.shape_cast %45 : vector<1x128xf32> to vector<1x1x128xf32>
    tpu.vector_store %arg5[%c0_37, %c1_38, %c0_39], %48 {strides = array<i32>} : memref<1x2x128xf32, #tpu.memory_space<vmem>>, vector<1x1x128xf32>,
    return
  }
  func.func @transform_0(%arg0: i32, %arg1: i32) -> (i32, i32, i32, i32) {
    %c0_i32 = arith.constant 0 : i32
    %c0_i32_0 = arith.constant 0 : i32
    %c0_i32_1 = arith.constant 0 : i32
    %c0_i32_2 = arith.constant 0 : i32
    return %arg0, %c0_i32, %c0_i32_0, %c0_i32_1 : i32, i32, i32, i32
  }
  func.func @transform_1(%arg0: i32, %arg1: i32) -> (i32, i32, i32) {
    %c0_i32 = arith.constant 0 : i32
    %c0_i32_0 = arith.constant 0 : i32
    %c0_i32_1 = arith.constant 0 : i32
    %c0_i32_2 = arith.constant 0 : i32
    return %c0_i32, %c0_i32_0, %c0_i32_1 : i32, i32, i32
  }
  func.func @transform_2(%arg0: i32, %arg1: i32) -> (i32, i32, i32) {
    %c1_i32 = arith.constant 1 : i32
    %0 = arith.muli %arg0, %c1_i32 : i32
    %1 = arith.addi %0, %arg1 : i32
    %c0_i32 = arith.constant 0 : i32
    %c0_i32_0 = arith.constant 0 : i32
    %c0_i32_1 = arith.constant 0 : i32
    return %1, %c0_i32, %c0_i32_0 : i32, i32, i32
  }
  func.func @transform_3(%arg0: i32, %arg1: i32) -> (i32, i32, i32) {
    %c1_i32 = arith.constant 1 : i32
    %0 = arith.muli %arg0, %c1_i32 : i32
    %1 = arith.addi %0, %arg1 : i32
    %c0_i32 = arith.constant 0 : i32
    %c0_i32_0 = arith.constant 0 : i32
    %c0_i32_1 = arith.constant 0 : i32
    return %1, %c0_i32, %c0_i32_0 : i32, i32, i32
  }
}

module attributes {stable_mosaic.version = 11 : i64} {
  func.func @_bn_relu_transpose_kernel(%arg0: i32, %arg1: i32, %arg2: memref<1x256x128xbf16, #tpu.memory_space<vmem>>, %arg3: memref<1x128xf32, #tpu.memory_space<vmem>>, %arg4: memref<1x128xf32, #tpu.memory_space<vmem>>, %arg5: memref<1x1x128x256xf32, #tpu.memory_space<vmem>>) attributes {dimension_semantics = [#tpu.dimension_semantics<parallel>, #tpu.dimension_semantics<parallel>], iteration_bounds = array<i64: 2, 1>, scalar_prefetch = 0 : i64, scratch_operands = 0 : i64, tpu.core_type = #tpu.core_type<tc>, window_params = [{transform_indices = @transform_0, window_bounds = array<i64: 1, 256, 128>}, {pipeline_mode = #tpu.pipeline_mode<synchronous>, transform_indices = @transform_1, window_bounds = array<i64: 1, 128>}, {pipeline_mode = #tpu.pipeline_mode<synchronous>, transform_indices = @transform_2, window_bounds = array<i64: 1, 128>}, {transform_indices = @transform_3, window_bounds = array<i64: 1, 1, 128, 256>}]} {
    %c0 = arith.constant 0 : index
    %c0_0 = arith.constant 0 : index
    %c0_1 = arith.constant 0 : index
    %0 = vector.load %arg2[%c0, %c0_0, %c0_1] : memref<1x256x128xbf16, #tpu.memory_space<vmem>>, vector<1x256x128xbf16>
    %1 = vector.shape_cast %0 : vector<1x256x128xbf16> to vector<256x128xbf16>
    %2 = arith.extf %1 : vector<256x128xbf16> to vector<256x128xf32>
    %c0_2 = arith.constant 0 : index
    %c0_3 = arith.constant 0 : index
    %3 = vector.load %arg3[%c0_2, %c0_3] : memref<1x128xf32, #tpu.memory_space<vmem>>, vector<1x128xf32>
    %4 = vector.broadcast %3 : vector<1x128xf32> to vector<256x128xf32>
    %5 = arith.mulf %2, %4 : vector<256x128xf32>
    %c0_4 = arith.constant 0 : index
    %c0_5 = arith.constant 0 : index
    %6 = vector.load %arg4[%c0_4, %c0_5] : memref<1x128xf32, #tpu.memory_space<vmem>>, vector<1x128xf32>
    %7 = vector.broadcast %6 : vector<1x128xf32> to vector<256x128xf32>
    %8 = arith.addf %5, %7 : vector<256x128xf32>
    %cst = arith.constant 0.000000e+00 : f32
    %9 = vector.broadcast %cst : f32 to vector<256x128xf32>
    %10 = arith.maximumf %8, %9 : vector<256x128xf32>
    %11 = tpu.transpose %10, [1, 0] : vector<256x128xf32> -> vector<128x256xf32>
    %c0_6 = arith.constant 0 : index
    %c0_7 = arith.constant 0 : index
    %c0_8 = arith.constant 0 : index
    %c0_9 = arith.constant 0 : index
    %12 = vector.load %arg5[%c0_6, %c0_7, %c0_8, %c0_9] : memref<1x1x128x256xf32, #tpu.memory_space<vmem>>, vector<1x1x128x256xf32>
    %13 = vector.shape_cast %12 : vector<1x1x128x256xf32> to vector<128x256xf32>
    %14 = vector.shape_cast %11 : vector<128x256xf32> to vector<1x1x128x256xf32>
    tpu.vector_store %arg5[%c0_6, %c0_7, %c0_8, %c0_9], %14 {strides = array<i32>} : memref<1x1x128x256xf32, #tpu.memory_space<vmem>>, vector<1x1x128x256xf32>,
    return
  }
  func.func @transform_0(%arg0: i32, %arg1: i32) -> (i32, i32, i32) {
    %c1_i32 = arith.constant 1 : i32
    %0 = arith.muli %arg0, %c1_i32 : i32
    %1 = arith.addi %0, %arg1 : i32
    %c0_i32 = arith.constant 0 : i32
    %c0_i32_0 = arith.constant 0 : i32
    %c0_i32_1 = arith.constant 0 : i32
    return %1, %c0_i32, %c0_i32_0 : i32, i32, i32
  }
  func.func @transform_1(%arg0: i32, %arg1: i32) -> (i32, i32) {
    %c0_i32 = arith.constant 0 : i32
    %c0_i32_0 = arith.constant 0 : i32
    %c0_i32_1 = arith.constant 0 : i32
    return %c0_i32, %c0_i32_0 : i32, i32
  }
  func.func @transform_2(%arg0: i32, %arg1: i32) -> (i32, i32) {
    %c0_i32 = arith.constant 0 : i32
    %c0_i32_0 = arith.constant 0 : i32
    %c0_i32_1 = arith.constant 0 : i32
    return %c0_i32, %c0_i32_0 : i32, i32
  }
  func.func @transform_3(%arg0: i32, %arg1: i32) -> (i32, i32, i32, i32) {
    %c0_i32 = arith.constant 0 : i32
    %c0_i32_0 = arith.constant 0 : i32
    %c0_i32_1 = arith.constant 0 : i32
    return %arg0, %arg1, %c0_i32, %c0_i32_0 : i32, i32, i32, i32
  }
}

</mosaic_0001>

<llo_original>
// kernel: conv_bn_relu.3
$region0: #{conv_bn_relu.3}
  #allocation0 [shape = 'u32[]', space=smem, size = 0x4, offset = 0x4, fixed_abs, tag = 'smem constant byte address 0x4 - core index']
  #allocation1 [shape = 'u32[144,128]{1,0:T(1,128)}', space=vmem, size = 0x12000, scoped, tag = 'internal scratch']
  %s0 = inlined_call_operand.vmem [shape: bf16[2,256,128], index: 0, kind: input, shape index: {}]
  %s1 = inlined_call_operand.vmem [shape: f32[1,128], index: 1, kind: input, shape index: {}]
  %s2 = inlined_call_operand.vmem [shape: f32[1,128], index: 2, kind: input, shape index: {}]
  %s3 = inlined_call_operand.vmem [shape: f32[2,1,128,256], index: 3, kind: output, shape index: {}]
  %s4 = sld [smem:[#allocation0]]
  $region45: #{conv_bn_relu.3} parent=0
    _
  %s6 = ssub.s32 1, %s4
  %s7 = scalar_select 0, %s6, %s4
  loop: start=0, step=1, limit=4
  $region2: #{conv_bn_relu.3} parent=0 // loop_pre_header
    _
  $region3: #{conv_bn_relu.3} parent=0 // loop_header
    %s9 = sphi 0, %s13
    %p10 = scmp.ge.s32.totalorder %s9, 4
    %s16 = sphi 0, %s28
    %s17 = sphi 0, %s24
    %s18 = sphi 0, %s16
    %s19 = sphi 0, %s17
    %s20 = sphi 0, %s18
    %s21 = sphi 0, %s19
    %s33 = sphi 0, %s35
    %s36 = sphi 0, %s33
    %s37 = sphi 0, %s36
    %s53 = sphi 0, %s37
    %s57 = sphi 0, %s57
    %s59 = sphi 0, %s57
    %s60 = sphi 0, %s59
    %s74 = sphi 0, %s60
    %s78 = sphi 0, %s78
    %s80 = sphi 0, %s78
    %s81 = sphi 0, %s80
    %s95 = sphi 0, %s81
    %s103 = sphi 0, %s105
    %s106 = sphi 0, %s103
    %s107 = sphi 0, %s106
    %s123 = sphi 0, %s107
  $region4: #{conv_bn_relu.3} parent=0 // loop_header_branch
    %12 = sbr.rel (%p10) target = $region8
  $region5: #{conv_bn_relu.3} parent=0 // loop_body
    %s14 = ssub.s32 %s9, 1
    %s15 = ssub.s32 %s9, 2
    %s22 = sadd.s32 1, %s17
    %p23 = scmp.ge.s32.totalorder %s22, 1
    %s24 = scalar_select %p23, 0, %s22
    %s25 = sadd.s32 1, %s16
    %s26 = scalar_select %p23, %s25, %s16
    %p27 = scmp.ge.s32.totalorder %s26, 2
    %s28 = scalar_select %p27, 0, %s26
    %s29 = sadd.s32 %s16, %s17
    %s30 = sadd.s32 %s28, %s24
    %s31 = ssub.s32 %s29, %s30
    %p32 = scmp.eq.s32.totalorder %s31, 0
    %s34 = sadd.s32 %s33, 1
    %s35 = scalar_select %p32, %s33, %s34
    %p38 = pneg %p32
    %p39 = scmp.eq.s32.totalorder %s9, 1
    %p40 = por %p38, %p39
    %p41 = scmp.ne.s32.totalorder %s33, %s36
    %p42 = scmp.eq.s32.totalorder %s9, 0
    %p43 = por %p41, %p42
    %p44 = scmp.ne.s32.totalorder %s33, %s36
    %p45 = scmp.eq.s32.totalorder %s14, 1
    %p46 = por %p44, %p45
    %p47 = scmp.ne.s32.totalorder %s36, %s37
    %p48 = scmp.eq.s32.totalorder %s14, 0
    %p49 = por %p47, %p48
    %p50 = scmp.ne.s32.totalorder %s36, %s37
    %p51 = scmp.eq.s32.totalorder %s15, 1
    %p52 = por %p50, %p51
    %p54 = scmp.ne.s32.totalorder %s37, %s53
    %p55 = scmp.eq.s32.totalorder %s15, 0
    %p56 = por %p54, %p55
    %s58 = sadd.s32 %s57, 1
    %p61 = scmp.eq.s32.totalorder %s9, 1
    %p62 = scmp.ne.s32.totalorder %s57, %s59
    %p63 = scmp.eq.s32.totalorder %s9, 0
    %p64 = por %p62, %p63
    %p65 = scmp.ne.s32.totalorder %s57, %s59
    %p66 = scmp.eq.s32.totalorder %s14, 1
    %p67 = por %p65, %p66
    %p68 = scmp.ne.s32.totalorder %s59, %s60
    %p69 = scmp.eq.s32.totalorder %s14, 0
    %p70 = por %p68, %p69
    %p71 = scmp.ne.s32.totalorder %s59, %s60
    %p72 = scmp.eq.s32.totalorder %s15, 1
    %p73 = por %p71, %p72
    %p75 = scmp.ne.s32.totalorder %s60, %s74
    %p76 = scmp.eq.s32.totalorder %s15, 0
    %p77 = por %p75, %p76
    %s79 = sadd.s32 %s78, 1
    %p82 = scmp.eq.s32.totalorder %s9, 1
    %p83 = scmp.ne.s32.totalorder %s78, %s80
    %p84 = scmp.eq.s32.totalorder %s9, 0
    %p85 = por %p83, %p84
    %p86 = scmp.ne.s32.totalorder %s78, %s80
    %p87 = scmp.eq.s32.totalorder %s14, 1
    %p88 = por %p86, %p87
    %p89 = scmp.ne.s32.totalorder %s80, %s81
    %p90 = scmp.eq.s32.totalorder %s14, 0
    %p91 = por %p89, %p90
    %p92 = scmp.ne.s32.totalorder %s80, %s81
    %p93 = scmp.eq.s32.totalorder %s15, 1
    %p94 = por %p92, %p93
    %p96 = scmp.ne.s32.totalorder %s81, %s95
    %p97 = scmp.eq.s32.totalorder %s15, 0
    %p98 = por %p96, %p97
    %s99 = ssub.s32 %s16, %s28
    %s100 = ssub.s32 %s17, %s24
    %s101 = sor.u32 %s99, %s100
    %p102 = scmp.eq.s32.totalorder %s101, 0
    %s104 = sadd.s32 %s103, 1
    %s105 = scalar_select %p102, %s103, %s104
    %p108 = pneg %p102
    %p109 = scmp.eq.s32.totalorder %s9, 1
    %p110 = por %p108, %p109
    %p111 = scmp.ne.s32.totalorder %s103, %s106
    %p112 = scmp.eq.s32.totalorder %s9, 0
    %p113 = por %p111, %p112
    %p114 = scmp.ne.s32.totalorder %s103, %s106
    %p115 = scmp.eq.s32.totalorder %s14, 1
    %p116 = por %p114, %p115
    %p117 = scmp.ne.s32.totalorder %s106, %s107
    %p118 = scmp.eq.s32.totalorder %s14, 0
    %p119 = por %p117, %p118
    %p120 = scmp.ne.s32.totalorder %s106, %s107
    %p121 = scmp.eq.s32.totalorder %s15, 1
    %p122 = por %p120, %p121
    %p124 = scmp.ne.s32.totalorder %s107, %s123
    %p125 = scmp.eq.s32.totalorder %s15, 0
    %p126 = por %p124, %p125
    %p127 = scmp.le.s32.totalorder 1, %s9
    %p128 = scmp.lt.s32.totalorder %s9, 3
    %p129 = pnand %p127, %p128
    %p130 = pneg %p129
    // Predicated region
    $region9: #{conv_bn_relu.3} parent=5 // pred_check
      _
    $region10: #{conv_bn_relu.3} parent=5 // pred_check_branch
      %132 = sbr.rel (%p129) target = $region12
    $region11: #{conv_bn_relu.3} parent=5 // pred_region
      %s133 = ssub.s32 %s9, 1
      // Predicated region
      $region13: #{conv_bn_relu.3} parent=11 // pred_check
        %p134 = pneg %p70
      $region14: #{conv_bn_relu.3} parent=11 // pred_check_branch
        %136 = sbr.rel (%p134) target = $region16
      $region15: #{conv_bn_relu.3} parent=11 // pred_region
        _
      $region16: #{conv_bn_relu.3} parent=11 // pred_fallthru
        _
      // Predicated region
      $region17: #{conv_bn_relu.3} parent=11 // pred_check
        %p137 = pneg %p91
      $region18: #{conv_bn_relu.3} parent=11 // pred_check_branch
        %139 = sbr.rel (%p137) target = $region20
      $region19: #{conv_bn_relu.3} parent=11 // pred_region
        _
      $region20: #{conv_bn_relu.3} parent=11 // pred_fallthru
        _
    $region12: #{conv_bn_relu.3} parent=5 // pred_fallthru
      _
    %p140 = scmp.lt.s32.totalorder %s9, 2
    // Predicated region
    $region21: #{conv_bn_relu.3} parent=5 // pred_check
      %p141 = pneg %p140
    $region22: #{conv_bn_relu.3} parent=5 // pred_check_branch
      %143 = sbr.rel (%p141) target = $region24
    $region23: #{conv_bn_relu.3} parent=5 // pred_region
      // Predicated region
      $region25: #{conv_bn_relu.3} parent=23 // pred_check
        %p144 = pneg %p43
      $region26: #{conv_bn_relu.3} parent=23 // pred_check_branch
        %146 = sbr.rel (%p144) target = $region28
      $region27: #{conv_bn_relu.3} parent=23 // pred_region
        %s147 = sadd.s32 %s16, %s17
        %p148 = scmp.lt.s32.totalorder %s147, 1
        %s149 = scalar_select %p148, %s147, 1
        %s150 = smul.addr %s149, 32
        %s151 = smul.addr %s150, 4
        %s152 = scalar_lea.vmem %s0, %s151
        %s153 = sadd.s32 %s16, %s17
      $region28: #{conv_bn_relu.3} parent=23 // pred_fallthru
        _
    $region24: #{conv_bn_relu.3} parent=5 // pred_fallthru
      _
    %p154 = scmp.le.s32.totalorder 1, %s9
    %p155 = scmp.lt.s32.totalorder %s9, 3
    %p156 = pnand %p154, %p155
    %p157 = pneg %p156
    // Predicated region
    $region29: #{conv_bn_relu.3} parent=5 // pred_check
      _
    $region30: #{conv_bn_relu.3} parent=5 // pred_check_branch
      %159 = sbr.rel (%p156) target = $region32
    $region31: #{conv_bn_relu.3} parent=5 // pred_region
      %s160 = ssub.s32 %s9, 1
      %s161 = sadd.s32 %s18, %s19
      %p162 = scmp.lt.s32.totalorder %s161, 1
      %s163 = scalar_select %p162, %s161, 1
      %s164 = smul.addr %s163, 32
      %s165 = smul.addr %s164, 4
      %s166 = scalar_lea.vmem %s0, %s165
      %p167 = pneg %p49
      %p168 = pneg %p46
      %p169 = pneg %p70
      %p170 = pneg %p67
      %p171 = pneg %p91
      %p172 = pneg %p88
      %p173 = pneg %p119
      %p174 = pneg %p116
      %p175 = scmp.lt.s32.totalorder %s18, 1
      %s176 = scalar_select %p175, %s18, 1
      %p177 = scmp.lt.s32.totalorder %s19, 0
      %s178 = scalar_select %p177, %s19, 0
      %s179 = smul.addr %s178, 32
      %s180 = smul.addr %s176, 32
      %s181 = sadd.s32 %s179, %s180
      %s182 = smul.addr %s181, 8
      %s183 = scalar_lea.vmem %s3, %s182
      %s184 = sadd.s32 %s18, %s19
      %p185 = scmp.lt.s32.totalorder %s184, 1
      %s186 = scalar_select %p185, %s184, 1
      %s187 = smul.addr %s186, 32
      %s188 = smul.addr %s187, 4
      %s189 = scalar_lea.vmem %s0, %s188
      %s190 = sadd.s32 %s18, %s19
      %p191 = scmp.lt.s32.totalorder %s18, 1
      %s192 = scalar_select %p191, %s18, 1
      %p193 = scmp.lt.s32.totalorder %s19, 0
      %s194 = scalar_select %p193, %s19, 0
      %s195 = smul.addr %s194, 32
      %s196 = smul.addr %s192, 32
      %s197 = sadd.s32 %s195, %s196
      %s198 = smul.addr %s197, 8
      %s199 = scalar_lea.vmem %s3, %s198
      %v200 = vld [vmem:[%s189] sm:$0xf]
      %v201 = vld [vmem:[%s189 + $0x4] sm:$0xf]
      %v202 = vld [vmem:[%s189 + $0x8] sm:$0xf]
      %v203 = vld [vmem:[%s189 + $0xc] sm:$0xf]
      %v204 = vld [vmem:[%s189 + $0x10] sm:$0xf]
      %v205 = vld [vmem:[%s189 + $0x14] sm:$0xf]
      %v206 = vld [vmem:[%s189 + $0x18] sm:$0xf]
      %v207 = vld [vmem:[%s189 + $0x1c] sm:$0xf]
      %v208 = vld [vmem:[%s189 + $0x20] sm:$0xf]
      %v209 = vld [vmem:[%s189 + $0x24] sm:$0xf]
      %v210 = vld [vmem:[%s189 + $0x28] sm:$0xf]
      %v211 = vld [vmem:[%s189 + $0x2c] sm:$0xf]
      %v212 = vld [vmem:[%s189 + $0x30] sm:$0xf]
      %v213 = vld [vmem:[%s189 + $0x34] sm:$0xf]
      %v214 = vld [vmem:[%s189 + $0x38] sm:$0xf]
      %v215 = vld [vmem:[%s189 + $0x3c] sm:$0xf]
      %v216 = vld [vmem:[%s189 + $0x40] sm:$0xf]
      %v217 = vld [vmem:[%s189 + $0x44] sm:$0xf]
      %v218 = vld [vmem:[%s189 + $0x48] sm:$0xf]
      %v219 = vld [vmem:[%s189 + $0x4c] sm:$0xf]
      %v220 = vld [vmem:[%s189 + $0x50] sm:$0xf]
      %v221 = vld [vmem:[%s189 + $0x54] sm:$0xf]
      %v222 = vld [vmem:[%s189 + $0x58] sm:$0xf]
      %v223 = vld [vmem:[%s189 + $0x5c] sm:$0xf]
      %v224 = vld [vmem:[%s189 + $0x60] sm:$0xf]
      %v225 = vld [vmem:[%s189 + $0x64] sm:$0xf]
      %v226 = vld [vmem:[%s189 + $0x68] sm:$0xf]
      %v227 = vld [vmem:[%s189 + $0x6c] sm:$0xf]
      %v228 = vld [vmem:[%s189 + $0x70] sm:$0xf]
      %v229 = vld [vmem:[%s189 + $0x74] sm:$0xf]
      %v230 = vld [vmem:[%s189 + $0x78] sm:$0xf]
      %v231 = vld [vmem:[%s189 + $0x7c] sm:$0xf]
      %v232 = vunpack.c.l.bf16 %v200
      %v233 = vunpack.c.l.bf16 %v201
      %v234 = vunpack.c.l.bf16 %v202
      %v235 = vunpack.c.l.bf16 %v203
      %v236 = vunpack.c.l.bf16 %v204
      %v237 = vunpack.c.l.bf16 %v205
      %v238 = vunpack.c.l.bf16 %v206
      %v239 = vunpack.c.l.bf16 %v207
      %v240 = vunpack.c.l.bf16 %v208
      %v241 = vunpack.c.l.bf16 %v209
      %v242 = vunpack.c.l.bf16 %v210
      %v243 = vunpack.c.l.bf16 %v211
      %v244 = vunpack.c.l.bf16 %v212
      %v245 = vunpack.c.l.bf16 %v213
      %v246 = vunpack.c.l.bf16 %v214
      %v247 = vunpack.c.l.bf16 %v215
      %v248 = vunpack.c.l.bf16 %v216
      %v249 = vunpack.c.l.bf16 %v217
      %v250 = vunpack.c.l.bf16 %v218
      %v251 = vunpack.c.l.bf16 %v219
      %v252 = vunpack.c.l.bf16 %v220
      %v253 = vunpack.c.l.bf16 %v221
      %v254 = vunpack.c.l.bf16 %v222
      %v255 = vunpack.c.l.bf16 %v223
      %v256 = vunpack.c.l.bf16 %v224
      %v257 = vunpack.c.l.bf16 %v225
      %v258 = vunpack.c.l.bf16 %v226
      %v259 = vunpack.c.l.bf16 %v227
      %v260 = vunpack.c.l.bf16 %v228
      %v261 = vunpack.c.l.bf16 %v229
      %v262 = vunpack.c.l.bf16 %v230
      %v263 = vunpack.c.l.bf16 %v231
      %v264 = vld [vmem:[%s1] sm:$0x1]
      %v266 = vlaneseq
      %v267 = vshrl.u32 %v266, 7
      %v268 = vsub.s32 0, %v267
      %v269 = vrot.slane %v264, %v268
      %v271 = vmul.f32 %v232, %v269
      %v272 = vmul.f32 %v233, %v269
      %v273 = vmul.f32 %v234, %v269
      %v274 = vmul.f32 %v235, %v269
      %v275 = vmul.f32 %v236, %v269
      %v276 = vmul.f32 %v237, %v269
      %v277 = vmul.f32 %v238, %v269
      %v278 = vmul.f32 %v239, %v269
      %v279 = vmul.f32 %v240, %v269
      %v280 = vmul.f32 %v241, %v269
      %v281 = vmul.f32 %v242, %v269
      %v282 = vmul.f32 %v243, %v269
      %v283 = vmul.f32 %v244, %v269
      %v284 = vmul.f32 %v245, %v269
      %v285 = vmul.f32 %v246, %v269
      %v286 = vmul.f32 %v247, %v269
      %v287 = vmul.f32 %v248, %v269
      %v288 = vmul.f32 %v249, %v269
      %v289 = vmul.f32 %v250, %v269
      %v290 = vmul.f32 %v251, %v269
      %v291 = vmul.f32 %v252, %v269
      %v292 = vmul.f32 %v253, %v269
      %v293 = vmul.f32 %v254, %v269
      %v294 = vmul.f32 %v255, %v269
      %v295 = vmul.f32 %v256, %v269
      %v296 = vmul.f32 %v257, %v269
      %v297 = vmul.f32 %v258, %v269
      %v298 = vmul.f32 %v259, %v269
      %v299 = vmul.f32 %v260, %v269
      %v300 = vmul.f32 %v261, %v269
      %v301 = vmul.f32 %v262, %v269
      %v302 = vmul.f32 %v263, %v269
      %v303 = vld [vmem:[%s2] sm:$0x1]
      %v305 = vlaneseq
      %v306 = vshrl.u32 %v305, 7
      %v307 = vsub.s32 0, %v306
      %v308 = vrot.slane %v303, %v307
      %v310 = vadd.f32 %v271, %v308
      %v311 = vadd.f32 %v272, %v308
      %v312 = vadd.f32 %v273, %v308
      %v313 = vadd.f32 %v274, %v308
      %v314 = vadd.f32 %v275, %v308
      %v315 = vadd.f32 %v276, %v308
      %v316 = vadd.f32 %v277, %v308
      %v317 = vadd.f32 %v278, %v308
      %v318 = vadd.f32 %v279, %v308
      %v319 = vadd.f32 %v280, %v308
      %v320 = vadd.f32 %v281, %v308
      %v321 = vadd.f32 %v282, %v308
      %v322 = vadd.f32 %v283, %v308
      %v323 = vadd.f32 %v284, %v308
      %v324 = vadd.f32 %v285, %v308
      %v325 = vadd.f32 %v286, %v308
      %v326 = vadd.f32 %v287, %v308
      %v327 = vadd.f32 %v288, %v308
      %v328 = vadd.f32 %v289, %v308
      %v329 = vadd.f32 %v290, %v308
      %v330 = vadd.f32 %v291, %v308
      %v331 = vadd.f32 %v292, %v308
      %v332 = vadd.f32 %v293, %v308
      %v333 = vadd.f32 %v294, %v308
      %v334 = vadd.f32 %v295, %v308
      %v335 = vadd.f32 %v296, %v308
      %v336 = vadd.f32 %v297, %v308
      %v337 = vadd.f32 %v298, %v308
      %v338 = vadd.f32 %v299, %v308
      %v339 = vadd.f32 %v300, %v308
      %v340 = vadd.f32 %v301, %v308
      %v341 = vadd.f32 %v302, %v308
      %v342 = vmax.f32 %v310, 0.0
      %v343 = vmax.f32 %v311, 0.0
      %v344 = vmax.f32 %v312, 0.0
      %v345 = vmax.f32 %v313, 0.0
      %v346 = vmax.f32 %v314, 0.0
      %v347 = vmax.f32 %v315, 0.0
      %v348 = vmax.f32 %v316, 0.0
      %v349 = vmax.f32 %v317, 0.0
      %v350 = vmax.f32 %v318, 0.0
      %v351 = vmax.f32 %v319, 0.0
      %v352 = vmax.f32 %v320, 0.0
      %v353 = vmax.f32 %v321, 0.0
      %v354 = vmax.f32 %v322, 0.0
      %v355 = vmax.f32 %v323, 0.0
      %v356 = vmax.f32 %v324, 0.0
      %v357 = vmax.f32 %v325, 0.0
      %v358 = vmax.f32 %v326, 0.0
      %v359 = vmax.f32 %v327, 0.0
      %v360 = vmax.f32 %v328, 0.0
      %v361 = vmax.f32 %v329, 0.0
      %v362 = vmax.f32 %v330, 0.0
      %v363 = vmax.f32 %v331, 0.0
      %v364 = vmax.f32 %v332, 0.0
      %v365 = vmax.f32 %v333, 0.0
      %v366 = vmax.f32 %v334, 0.0
      %v367 = vmax.f32 %v335, 0.0
      %v368 = vmax.f32 %v336, 0.0
      %v369 = vmax.f32 %v337, 0.0
      %v370 = vmax.f32 %v338, 0.0
      %v371 = vmax.f32 %v339, 0.0
      %v372 = vmax.f32 %v340, 0.0
      %v373 = vmax.f32 %v341, 0.0
      %374 = vxpose.xlu0.b32.start [1/16] %v342, 128
      %375 = vxpose.xlu0.b32.cont [2/16] %v343, 128
      %376 = vxpose.xlu0.b32.cont [3/16] %v344, 128
      %377 = vxpose.xlu0.b32.cont [4/16] %v345, 128
      %378 = vxpose.xlu0.b32.cont [5/16] %v346, 128
      %379 = vxpose.xlu0.b32.cont [6/16] %v347, 128
      %380 = vxpose.xlu0.b32.cont [7/16] %v348, 128
      %381 = vxpose.xlu0.b32.cont [8/16] %v349, 128
      %382 = vxpose.xlu0.b32.cont [9/16] %v350, 128
      %383 = vxpose.xlu0.b32.cont [10/16] %v351, 128
      %384 = vxpose.xlu0.b32.cont [11/16] %v352, 128
      %385 = vxpose.xlu0.b32.cont [12/16] %v353, 128
      %386 = vxpose.xlu0.b32.cont [13/16] %v354, 128
      %387 = vxpose.xlu0.b32.cont [14/16] %v355, 128
      %388 = vxpose.xlu0.b32.cont [15/16] %v356, 128
      %389 = vxpose.xlu0.b32.end [16/16] %v357, 128
      %v390 = vpop.trf.xlu0
      %v391 = vpop.trf.xlu0
      %v392 = vpop.trf.xlu0
      %v393 = vpop.trf.xlu0
      %v394 = vpop.trf.xlu0
      %v395 = vpop.trf.xlu0
      %v396 = vpop.trf.xlu0
      %v397 = vpop.trf.xlu0
      %v398 = vpop.trf.xlu0
      %v399 = vpop.trf.xlu0
      %v400 = vpop.trf.xlu0
      %v401 = vpop.trf.xlu0
      %v402 = vpop.trf.xlu0
      %v403 = vpop.trf.xlu0
      %v404 = vpop.trf.xlu0
      %v405 = vpop.trf.xlu0
      %406 = vxpose.xlu0.b32.start [1/16] %v358, 128
      %407 = vxpose.xlu0.b32.cont [2/16] %v359, 128
      %408 = vxpose.xlu0.b32.cont [3/16] %v360, 128
      %409 = vxpose.xlu0.b32.cont [4/16] %v361, 128
      %410 = vxpose.xlu0.b32.cont [5/16] %v362, 128
      %411 = vxpose.xlu0.b32.cont [6/16] %v363, 128
      %412 = vxpose.xlu0.b32.cont [7/16] %v364, 128
      %413 = vxpose.xlu0.b32.cont [8/16] %v365, 128
      %414 = vxpose.xlu0.b32.cont [9/16] %v366, 128
      %415 = vxpose.xlu0.b32.cont [10/16] %v367, 128
      %416 = vxpose.xlu0.b32.cont [11/16] %v368, 128
      %417 = vxpose.xlu0.b32.cont [12/16] %v369, 128
      %418 = vxpose.xlu0.b32.cont [13/16] %v370, 128
      %419 = vxpose.xlu0.b32.cont [14/16] %v371, 128
      %420 = vxpose.xlu0.b32.cont [15/16] %v372, 128
      %421 = vxpose.xlu0.b32.end [16/16] %v373, 128
      %v422 = vpop.trf.xlu0
      %v423 = vpop.trf.xlu0
      %v424 = vpop.trf.xlu0
      %v425 = vpop.trf.xlu0
      %v426 = vpop.trf.xlu0
      %v427 = vpop.trf.xlu0
      %v428 = vpop.trf.xlu0
      %v429 = vpop.trf.xlu0
      %v430 = vpop.trf.xlu0
      %v431 = vpop.trf.xlu0
      %v432 = vpop.trf.xlu0
      %v433 = vpop.trf.xlu0
      %v434 = vpop.trf.xlu0
      %v435 = vpop.trf.xlu0
      %v436 = vpop.trf.xlu0
      %v437 = vpop.trf.xlu0
      %438 = vst [vmem:[%s199] sm:$0xff] %v390
      %439 = vst [vmem:[%s199 + $0x8] sm:$0xff] %v422
      %440 = vst [vmem:[%s199 + $0x10] sm:$0xff] %v391
      %441 = vst [vmem:[%s199 + $0x18] sm:$0xff] %v423
      %442 = vst [vmem:[%s199 + $0x20] sm:$0xff] %v392
      %443 = vst [vmem:[%s199 + $0x28] sm:$0xff] %v424
      %444 = vst [vmem:[%s199 + $0x30] sm:$0xff] %v393
      %445 = vst [vmem:[%s199 + $0x38] sm:$0xff] %v425
      %446 = vst [vmem:[%s199 + $0x40] sm:$0xff] %v394
      %447 = vst [vmem:[%s199 + $0x48] sm:$0xff] %v426
      %448 = vst [vmem:[%s199 + $0x50] sm:$0xff] %v395
      %449 = vst [vmem:[%s199 + $0x58] sm:$0xff] %v427
      %450 = vst [vmem:[%s199 + $0x60] sm:$0xff] %v396
      %451 = vst [vmem:[%s199 + $0x68] sm:$0xff] %v428
      %452 = vst [vmem:[%s199 + $0x70] sm:$0xff] %v397
      %453 = vst [vmem:[%s199 + $0x78] sm:$0xff] %v429
      %454 = vst [vmem:[%s199 + $0x80] sm:$0xff] %v398
      %455 = vst [vmem:[%s199 + $0x88] sm:$0xff] %v430
      %456 = vst [vmem:[%s199 + $0x90] sm:$0xff] %v399
      %457 = vst [vmem:[%s199 + $0x98] sm:$0xff] %v431
      %458 = vst [vmem:[%s199 + $0xa0] sm:$0xff] %v400
      %459 = vst [vmem:[%s199 + $0xa8] sm:$0xff] %v432
      %460 = vst [vmem:[%s199 + $0xb0] sm:$0xff] %v401
      %461 = vst [vmem:[%s199 + $0xb8] sm:$0xff] %v433
      %462 = vst [vmem:[%s199 + $0xc0] sm:$0xff] %v402
      %463 = vst [vmem:[%s199 + $0xc8] sm:$0xff] %v434
      %464 = vst [vmem:[%s199 + $0xd0] sm:$0xff] %v403
      %465 = vst [vmem:[%s199 + $0xd8] sm:$0xff] %v435
      %466 = vst [vmem:[%s199 + $0xe0] sm:$0xff] %v404
      %467 = vst [vmem:[%s199 + $0xe8] sm:$0xff] %v436
      %468 = vst [vmem:[%s199 + $0xf0] sm:$0xff] %v405
      %469 = vst [vmem:[%s199 + $0xf8] sm:$0xff] %v437
      %p470 = scmp.lt.s32.totalorder %s18, 1
      %s471 = scalar_select %p470, %s18, 1
      %p472 = scmp.lt.s32.totalorder %s19, 0
      %s473 = scalar_select %p472, %s19, 0
      %s474 = smul.addr %s473, 32
      %s475 = smul.addr %s471, 32
      %s476 = sadd.s32 %s474, %s475
      %s477 = smul.addr %s476, 8
      %s478 = scalar_lea.vmem %s3, %s477
      // Predicated region
      $region33: #{conv_bn_relu.3} parent=31 // pred_check
        %p479 = pneg %p116
      $region34: #{conv_bn_relu.3} parent=31 // pred_check_branch
        %481 = sbr.rel (%p479) target = $region36
      $region35: #{conv_bn_relu.3} parent=31 // pred_region
        _
      $region36: #{conv_bn_relu.3} parent=31 // pred_fallthru
        _
    $region32: #{conv_bn_relu.3} parent=5 // pred_fallthru
      _
    %p482 = scmp.le.s32.totalorder 2, %s9
    // Predicated region
    $region37: #{conv_bn_relu.3} parent=5 // pred_check
      %p483 = pneg %p482
    $region38: #{conv_bn_relu.3} parent=5 // pred_check_branch
      %485 = sbr.rel (%p483) target = $region40
    $region39: #{conv_bn_relu.3} parent=5 // pred_region
      %s486 = ssub.s32 %s9, 2
      // Predicated region
      $region41: #{conv_bn_relu.3} parent=39 // pred_check
        %p487 = pneg %p122
      $region42: #{conv_bn_relu.3} parent=39 // pred_check_branch
        %489 = sbr.rel (%p487) target = $region44
      $region43: #{conv_bn_relu.3} parent=39 // pred_region
        %p490 = scmp.lt.s32.totalorder %s20, 1
        %s491 = scalar_select %p490, %s20, 1
        %p492 = scmp.lt.s32.totalorder %s21, 0
        %s493 = scalar_select %p492, %s21, 0
        %s494 = smul.addr %s493, 32
        %s495 = smul.addr %s491, 32
        %s496 = sadd.s32 %s494, %s495
        %s497 = smul.addr %s496, 8
        %s498 = scalar_lea.vmem %s3, %s497
      $region44: #{conv_bn_relu.3} parent=39 // pred_fallthru
        _
    $region40: #{conv_bn_relu.3} parent=5 // pred_fallthru
      _
  $region6: #{conv_bn_relu.3} parent=0 // loop_footer
    %s13 = sadd.s32 1, %s9
  $region7: #{conv_bn_relu.3} parent=0 // loop_footer_branch
    %8 = sbr.rel target = $region3
  $region8: #{conv_bn_relu.3} parent=0 // loop_exit
    _

// kernel: conv_bn_relu.2
$region0: #{conv_bn_relu.2}
  #allocation0 [shape = 'u32[]', space=smem, size = 0x4, offset = 0x4, fixed_abs, tag = 'smem constant byte address 0x4 - core index']
  #allocation1 [shape = 'u32[144,128]{1,0:T(1,128)}', space=vmem, size = 0x12000, scoped, tag = 'internal scratch']
  #allocation2 [shape = 'f32[256,128]{1,0:T(8,128)}', space=vmem, size = 0x20000, scoped, tag = 'scratch operand']
  %s0 = inlined_call_operand.vmem [shape: bf16[2,18,16,24], index: 0, kind: input, shape index: {}]
  %s1 = inlined_call_operand.vmem [shape: bf16[3,24,128], index: 1, kind: input, shape index: {}]
  %s2 = inlined_call_operand.vmem [shape: bf16[2,256,128], index: 2, kind: output, shape index: {0}]
  %s3 = inlined_call_operand.vmem [shape: f32[2,2,128], index: 3, kind: output, shape index: {1}]
  %4 = xla_tuple %s2, %s3
  %s5 = sld [smem:[#allocation0]]
  $region49: #{conv_bn_relu.2} parent=0
    _
  %s7 = ssub.s32 1, %s5
  %s8 = scalar_select 0, %s7, %s5
  loop: start=0, step=1, limit=4
  $region2: #{conv_bn_relu.2} parent=0 // loop_pre_header
    _
  $region3: #{conv_bn_relu.2} parent=0 // loop_header
    %s10 = sphi 0, %s14
    %p11 = scmp.ge.s32.totalorder %s10, 4
    %s17 = sphi 0, %s29
    %s18 = sphi 0, %s25
    %s19 = sphi 0, %s17
    %s20 = sphi 0, %s18
    %s21 = sphi 0, %s19
    %s22 = sphi 0, %s20
    %s32 = sphi 0, %s34
    %s35 = sphi 0, %s32
    %s36 = sphi 0, %s35
    %s52 = sphi 0, %s36
    %s56 = sphi 0, %s56
    %s58 = sphi 0, %s56
    %s59 = sphi 0, %s58
    %s73 = sphi 0, %s59
    %s81 = sphi 0, %s83
    %s84 = sphi 0, %s81
    %s85 = sphi 0, %s84
    %s101 = sphi 0, %s85
    %s109 = sphi 0, %s111
    %s112 = sphi 0, %s109
    %s113 = sphi 0, %s112
    %s129 = sphi 0, %s113
  $region4: #{conv_bn_relu.2} parent=0 // loop_header_branch
    %13 = sbr.rel (%p11) target = $region8
  $region5: #{conv_bn_relu.2} parent=0 // loop_body
    %s15 = ssub.s32 %s10, 1
    %s16 = ssub.s32 %s10, 2
    %s23 = sadd.s32 1, %s18
    %p24 = scmp.ge.s32.totalorder %s23, 1
    %s25 = scalar_select %p24, 0, %s23
    %s26 = sadd.s32 1, %s17
    %s27 = scalar_select %p24, %s26, %s17
    %p28 = scmp.ge.s32.totalorder %s27, 2
    %s29 = scalar_select %p28, 0, %s27
    %s30 = ssub.s32 %s17, %s29
    %p31 = scmp.eq.s32.totalorder %s30, 0
    %s33 = sadd.s32 %s32, 1
    %s34 = scalar_select %p31, %s32, %s33
    %p37 = pneg %p31
    %p38 = scmp.eq.s32.totalorder %s10, 1
    %p39 = por %p37, %p38
    %p40 = scmp.ne.s32.totalorder %s32, %s35
    %p41 = scmp.eq.s32.totalorder %s10, 0
    %p42 = por %p40, %p41
    %p43 = scmp.ne.s32.totalorder %s32, %s35
    %p44 = scmp.eq.s32.totalorder %s15, 1
    %p45 = por %p43, %p44
    %p46 = scmp.ne.s32.totalorder %s35, %s36
    %p47 = scmp.eq.s32.totalorder %s15, 0
    %p48 = por %p46, %p47
    %p49 = scmp.ne.s32.totalorder %s35, %s36
    %p50 = scmp.eq.s32.totalorder %s16, 1
    %p51 = por %p49, %p50
    %p53 = scmp.ne.s32.totalorder %s36, %s52
    %p54 = scmp.eq.s32.totalorder %s16, 0
    %p55 = por %p53, %p54
    %s57 = sadd.s32 %s56, 1
    %p60 = scmp.eq.s32.totalorder %s10, 1
    %p61 = scmp.ne.s32.totalorder %s56, %s58
    %p62 = scmp.eq.s32.totalorder %s10, 0
    %p63 = por %p61, %p62
    %p64 = scmp.ne.s32.totalorder %s56, %s58
    %p65 = scmp.eq.s32.totalorder %s15, 1
    %p66 = por %p64, %p65
    %p67 = scmp.ne.s32.totalorder %s58, %s59
    %p68 = scmp.eq.s32.totalorder %s15, 0
    %p69 = por %p67, %p68
    %p70 = scmp.ne.s32.totalorder %s58, %s59
    %p71 = scmp.eq.s32.totalorder %s16, 1
    %p72 = por %p70, %p71
    %p74 = scmp.ne.s32.totalorder %s59, %s73
    %p75 = scmp.eq.s32.totalorder %s16, 0
    %p76 = por %p74, %p75
    %s77 = sadd.s32 %s17, %s18
    %s78 = sadd.s32 %s29, %s25
    %s79 = ssub.s32 %s77, %s78
    %p80 = scmp.eq.s32.totalorder %s79, 0
    %s82 = sadd.s32 %s81, 1
    %s83 = scalar_select %p80, %s81, %s82
    %p86 = pneg %p80
    %p87 = scmp.eq.s32.totalorder %s10, 1
    %p88 = por %p86, %p87
    %p89 = scmp.ne.s32.totalorder %s81, %s84
    %p90 = scmp.eq.s32.totalorder %s10, 0
    %p91 = por %p89, %p90
    %p92 = scmp.ne.s32.totalorder %s81, %s84
    %p93 = scmp.eq.s32.totalorder %s15, 1
    %p94 = por %p92, %p93
    %p95 = scmp.ne.s32.totalorder %s84, %s85
    %p96 = scmp.eq.s32.totalorder %s15, 0
    %p97 = por %p95, %p96
    %p98 = scmp.ne.s32.totalorder %s84, %s85
    %p99 = scmp.eq.s32.totalorder %s16, 1
    %p100 = por %p98, %p99
    %p102 = scmp.ne.s32.totalorder %s85, %s101
    %p103 = scmp.eq.s32.totalorder %s16, 0
    %p104 = por %p102, %p103
    %s105 = sadd.s32 %s17, %s18
    %s106 = sadd.s32 %s29, %s25
    %s107 = ssub.s32 %s105, %s106
    %p108 = scmp.eq.s32.totalorder %s107, 0
    %s110 = sadd.s32 %s109, 1
    %s111 = scalar_select %p108, %s109, %s110
    %p114 = pneg %p108
    %p115 = scmp.eq.s32.totalorder %s10, 1
    %p116 = por %p114, %p115
    %p117 = scmp.ne.s32.totalorder %s109, %s112
    %p118 = scmp.eq.s32.totalorder %s10, 0
    %p119 = por %p117, %p118
    %p120 = scmp.ne.s32.totalorder %s109, %s112
    %p121 = scmp.eq.s32.totalorder %s15, 1
    %p122 = por %p120, %p121
    %p123 = scmp.ne.s32.totalorder %s112, %s113
    %p124 = scmp.eq.s32.totalorder %s15, 0
    %p125 = por %p123, %p124
    %p126 = scmp.ne.s32.totalorder %s112, %s113
    %p127 = scmp.eq.s32.totalorder %s16, 1
    %p128 = por %p126, %p127
    %p130 = scmp.ne.s32.totalorder %s113, %s129
    %p131 = scmp.eq.s32.totalorder %s16, 0
    %p132 = por %p130, %p131
    %p133 = scmp.le.s32.totalorder 1, %s10
    %p134 = scmp.lt.s32.totalorder %s10, 3
    %p135 = pnand %p133, %p134
    %p136 = pneg %p135
    // Predicated region
    $region9: #{conv_bn_relu.2} parent=5 // pred_check
      _
    $region10: #{conv_bn_relu.2} parent=5 // pred_check_branch
      %138 = sbr.rel (%p135) target = $region12
    $region11: #{conv_bn_relu.2} parent=5 // pred_region
      %s139 = ssub.s32 %s10, 1
      // Predicated region
      $region13: #{conv_bn_relu.2} parent=11 // pred_check
        %p140 = pneg %p69
      $region14: #{conv_bn_relu.2} parent=11 // pred_check_branch
        %142 = sbr.rel (%p140) target = $region16
      $region15: #{conv_bn_relu.2} parent=11 // pred_region
        _
      $region16: #{conv_bn_relu.2} parent=11 // pred_fallthru
        _
    $region12: #{conv_bn_relu.2} parent=5 // pred_fallthru
      _
    %p143 = scmp.lt.s32.totalorder %s10, 2
    // Predicated region
    $region17: #{conv_bn_relu.2} parent=5 // pred_check
      %p144 = pneg %p143
    $region18: #{conv_bn_relu.2} parent=5 // pred_check_branch
      %146 = sbr.rel (%p144) target = $region20
    $region19: #{conv_bn_relu.2} parent=5 // pred_region
      // Predicated region
      $region21: #{conv_bn_relu.2} parent=19 // pred_check
        %p147 = pneg %p42
      $region22: #{conv_bn_relu.2} parent=19 // pred_check_branch
        %149 = sbr.rel (%p147) target = $region24
      $region23: #{conv_bn_relu.2} parent=19 // pred_region
        %p150 = scmp.lt.s32.totalorder %s17, 1
        %s151 = scalar_select %p150, %s17, 1
        %s152 = smul.addr %s151, 36
        %s153 = smul.addr %s152, 4
        %s154 = scalar_lea.vmem %s0, %s153
      $region24: #{conv_bn_relu.2} parent=19 // pred_fallthru
        _
    $region20: #{conv_bn_relu.2} parent=5 // pred_fallthru
      _
    %p155 = scmp.le.s32.totalorder 1, %s10
    %p156 = scmp.lt.s32.totalorder %s10, 3
    %p157 = pnand %p155, %p156
    %p158 = pneg %p157
    // Predicated region
    $region25: #{conv_bn_relu.2} parent=5 // pred_check
      _
    $region26: #{conv_bn_relu.2} parent=5 // pred_check_branch
      %160 = sbr.rel (%p157) target = $region28
    $region27: #{conv_bn_relu.2} parent=5 // pred_region
      %s161 = ssub.s32 %s10, 1
      %p162 = scmp.lt.s32.totalorder %s19, 1
      %s163 = scalar_select %p162, %s19, 1
      %s164 = smul.addr %s163, 36
      %s165 = smul.addr %s164, 4
      %s166 = scalar_lea.vmem %s0, %s165
      %p167 = pneg %p48
      %p168 = pneg %p45
      %p169 = pneg %p69
      %p170 = pneg %p66
      %p171 = pneg %p97
      %p172 = pneg %p94
      %s173 = sadd.s32 %s19, %s20
      %p174 = scmp.lt.s32.totalorder %s173, 1
      %s175 = scalar_select %p174, %s173, 1
      %s176 = smul.addr %s175, 32
      %s177 = smul.addr %s176, 4
      %s178 = scalar_lea.vmem %s2, %s177
      %p179 = pneg %p125
      %p180 = pneg %p122
      %s181 = sadd.s32 %s19, %s20
      %p182 = scmp.lt.s32.totalorder %s181, 1
      %s183 = scalar_select %p182, %s181, 1
      %s184 = smul.addr %s183, 2
      %s185 = scalar_lea.vmem %s3, %s184
      %p186 = scmp.lt.s32.totalorder %s19, 1
      %s187 = scalar_select %p186, %s19, 1
      %s188 = smul.addr %s187, 36
      %s189 = smul.addr %s188, 4
      %s190 = scalar_lea.vmem %s0, %s189
      %s191 = sadd.s32 %s19, %s20
      %p192 = scmp.lt.s32.totalorder %s191, 1
      %s193 = scalar_select %p192, %s191, 1
      %s194 = smul.addr %s193, 32
      %s195 = smul.addr %s194, 4
      %s196 = scalar_lea.vmem %s2, %s195
      %s197 = sadd.s32 %s19, %s20
      %s198 = sadd.s32 %s19, %s20
      %p199 = scmp.lt.s32.totalorder %s198, 1
      %s200 = scalar_select %p199, %s198, 1
      %s201 = smul.addr %s200, 2
      %s202 = scalar_lea.vmem %s3, %s201
      %s203 = sadd.s32 %s19, %s20
      %s205 = smul.u32 %s20, 16
      %s206 = smul.u32 %s205, 2
      %s207 = smul.addr %s206, 4
      %s208 = scalar_lea.vmem %s190, %s207
      %v209 = vld [vmem:[%s208] sm:$0xf]
      %v210 = vld [vmem:[%s208 + $0x4] sm:$0xf]
      %v211 = vld [vmem:[%s208 + $0x8] sm:$0xf]
      %v212 = vld [vmem:[%s208 + $0xc] sm:$0xf]
      %v213 = vld [vmem:[%s208 + $0x10] sm:$0xf]
      %v214 = vld [vmem:[%s208 + $0x14] sm:$0xf]
      %v215 = vld [vmem:[%s208 + $0x18] sm:$0xf]
      %v216 = vld [vmem:[%s208 + $0x1c] sm:$0xf]
      %v217 = vld [vmem:[%s208 + $0x20] sm:$0xf]
      %v218 = vld [vmem:[%s208 + $0x24] sm:$0xf]
      %v219 = vld [vmem:[%s208 + $0x28] sm:$0xf]
      %v220 = vld [vmem:[%s208 + $0x2c] sm:$0xf]
      %v221 = vld [vmem:[%s208 + $0x30] sm:$0xf]
      %v222 = vld [vmem:[%s208 + $0x34] sm:$0xf]
      %v223 = vld [vmem:[%s208 + $0x38] sm:$0xf]
      %v224 = vld [vmem:[%s208 + $0x3c] sm:$0xf]
      %v225 = vld [vmem:[%s208 + $0x40] sm:$0xf]
      %v226 = vld [vmem:[%s208 + $0x44] sm:$0xf]
      %v227 = vld [vmem:[%s208 + $0x48] sm:$0xf]
      %v228 = vld [vmem:[%s208 + $0x4c] sm:$0xf]
      %v229 = vld [vmem:[%s208 + $0x50] sm:$0xf]
      %v230 = vld [vmem:[%s208 + $0x54] sm:$0xf]
      %v231 = vld [vmem:[%s208 + $0x58] sm:$0xf]
      %v232 = vld [vmem:[%s208 + $0x5c] sm:$0xf]
      %v233 = vld [vmem:[%s208 + $0x60] sm:$0xf]
      %v234 = vld [vmem:[%s208 + $0x64] sm:$0xf]
      %v235 = vld [vmem:[%s208 + $0x68] sm:$0xf]
      %v236 = vld [vmem:[%s208 + $0x6c] sm:$0xf]
      %v237 = vld [vmem:[%s208 + $0x70] sm:$0xf]
      %v238 = vld [vmem:[%s208 + $0x74] sm:$0xf]
      %v239 = vld [vmem:[%s208 + $0x78] sm:$0xf]
      %v240 = vld [vmem:[%s208 + $0x7c] sm:$0xf]
      %v241 = vld [vmem:[%s1] sm:$0xf]
      %v242 = vld [vmem:[%s1 + $0x4] sm:$0xf]
      %v243 = vld [vmem:[%s1 + $0x8] sm:$0xf]
      %v276 = vunpack.c.l.b16 %v209
      %v277 = vunpack.c.l.b16 %v210
      %v278 = vunpack.c.l.b16 %v211
      %v279 = vunpack.c.l.b16 %v212
      %v280 = vunpack.c.l.b16 %v213
      %v281 = vunpack.c.l.b16 %v214
      %v282 = vunpack.c.l.b16 %v215
      %v283 = vunpack.c.l.b16 %v216
      %v284 = vunpack.c.l.b16 %v217
      %v285 = vunpack.c.l.b16 %v218
      %v286 = vunpack.c.l.b16 %v219
      %v287 = vunpack.c.l.b16 %v220
      %v288 = vunpack.c.l.b16 %v221
      %v289 = vunpack.c.l.b16 %v222
      %v290 = vunpack.c.l.b16 %v223
      %v291 = vunpack.c.l.b16 %v224
      %v292 = vunpack.c.l.b16 %v225
      %v293 = vunpack.c.l.b16 %v226
      %v294 = vunpack.c.l.b16 %v227
      %v295 = vunpack.c.l.b16 %v228
      %v296 = vunpack.c.l.b16 %v229
      %v297 = vunpack.c.l.b16 %v230
      %v298 = vunpack.c.l.b16 %v231
      %v299 = vunpack.c.l.b16 %v232
      %v300 = vunpack.c.l.b16 %v233
      %v301 = vunpack.c.l.b16 %v234
      %v302 = vunpack.c.l.b16 %v235
      %v303 = vunpack.c.l.b16 %v236
      %v304 = vunpack.c.l.b16 %v237
      %v305 = vunpack.c.l.b16 %v238
      %v306 = vunpack.c.l.b16 %v239
      %v307 = vunpack.c.l.b16 %v240
      %v308 = vpack.c.b16 %v277, %v276
      %v309 = vpack.c.b16 %v279, %v278
      %v310 = vpack.c.b16 %v281, %v280
      %v311 = vpack.c.b16 %v283, %v282
      %v312 = vpack.c.b16 %v285, %v284
      %v313 = vpack.c.b16 %v287, %v286
      %v314 = vpack.c.b16 %v289, %v288
      %v315 = vpack.c.b16 %v291, %v290
      %v316 = vpack.c.b16 %v293, %v292
      %v317 = vpack.c.b16 %v295, %v294
      %v318 = vpack.c.b16 %v297, %v296
      %v319 = vpack.c.b16 %v299, %v298
      %v320 = vpack.c.b16 %v301, %v300
      %v321 = vpack.c.b16 %v303, %v302
      %v322 = vpack.c.b16 %v305, %v304
      %v323 = vpack.c.b16 %v307, %v306
      %v327 = vunpack.c.l.b16 %v241
      %v328 = vunpack.c.l.b16 %v242
      %v329 = vunpack.c.l.b16 %v243
      %v330 = vpack.c.b16 %v328, %v327
      %v331 = vpack.c.b16 %v329, %v329
      %vm333 = vcmask 195584
      %v335 = vsel %vm333, %v308, 0
      %v338 = vsel %vm333, %v309, 0
      %v341 = vsel %vm333, %v310, 0
      %v344 = vsel %vm333, %v311, 0
      %v347 = vsel %vm333, %v312, 0
      %v350 = vsel %vm333, %v313, 0
      %v353 = vsel %vm333, %v314, 0
      %v356 = vsel %vm333, %v315, 0
      %v359 = vsel %vm333, %v316, 0
      %v362 = vsel %vm333, %v317, 0
      %v365 = vsel %vm333, %v318, 0
      %v368 = vsel %vm333, %v319, 0
      %v371 = vsel %vm333, %v320, 0
      %v374 = vsel %vm333, %v321, 0
      %v377 = vsel %vm333, %v322, 0
      %v380 = vsel %vm333, %v323, 0
      %vm382 = vcmask 1043456
      %v384 = vsel %vm382, %v331, 0
      %386 = vmatprep.subr.bf16.mxu0 0
      %387 = vmatpush1.bf16.msra.mxu0 %v330
      %388 = vmatprep.subr.bf16.mxu0 0
      %389 = vmatpush1.bf16.msra.mxu0 %v384
      %390 = vmatprep.subr.bf16.mxu0 0
      %391 = vmatpush1.bf16.msra.mxu0 0
      %392 = vmatprep.subr.bf16.mxu0 0
      %393 = vmatpush1.bf16.msra.mxu0 0
      %394 = vmatprep.subr.bf16.mxu0 0
      %395 = vmatpush1.bf16.msra.mxu0 0
      %396 = vmatprep.subr.bf16.mxu0 0
      %397 = vmatpush1.bf16.msra.mxu0 0
      %398 = vmatprep.subr.bf16.mxu0 0
      %399 = vmatpush1.bf16.msra.mxu0 0
      %400 = vmatprep.subr.bf16.mxu0 0
      %401 = vmatpush1.bf16.msra.mxu0 0
      %402 = vmatprep.subr.bf16.mxu0 0
      %403 = vmatpush1.bf16.msra.mxu0 0
      %404 = vmatprep.subr.bf16.mxu0 0
      %405 = vmatpush1.bf16.msra.mxu0 0
      %406 = vmatprep.subr.bf16.mxu0 0
      %407 = vmatpush1.bf16.msra.mxu0 0
      %408 = vmatprep.subr.bf16.mxu0 0
      %409 = vmatpush1.bf16.msra.mxu0 0
      %410 = vmatprep.subr.bf16.mxu0 0
      %411 = vmatpush1.bf16.msra.mxu0 0
      %412 = vmatprep.subr.bf16.mxu0 0
      %413 = vmatpush1.bf16.msra.mxu0 0
      %414 = vmatprep.subr.bf16.mxu0 0
      %415 = vmatpush1.bf16.msra.mxu0 0
      %416 = vmatprep.subr.bf16.mxu0 0
      %417 = vmatpush1.bf16.msra.mxu0 0
      %418 = vmatprep.mubr.bf16.mxu0 0
      %419 = vmatmul.mubr.bf16.gmra.mrb[0].mxu0 %v335
      %v420 = vpop.f32.mrb[0].mxu0
      %v421 = vadd.f32 0.0, %v420
      %v422 = vpop.f32.mrb[0].mxu0
      %v423 = vpop.f32.mrb[0].mxu0
      %v424 = vadd.f32 0.0, %v423
      %v425 = vpop.f32.mrb[0].mxu0
      %426 = vmatprep.mubr.bf16.mxu0 0
      %427 = vmatmul.mubr.bf16.gmra.mrb[0].mxu0 %v338
      %v428 = vpop.f32.mrb[0].mxu0
      %v429 = vadd.f32 0.0, %v428
      %v430 = vpop.f32.mrb[0].mxu0
      %v431 = vpop.f32.mrb[0].mxu0
      %v432 = vadd.f32 0.0, %v431
      %v433 = vpop.f32.mrb[0].mxu0
      %434 = vmatprep.mubr.bf16.mxu0 0
      %435 = vmatmul.mubr.bf16.gmra.mrb[0].mxu0 %v341
      %v436 = vpop.f32.mrb[0].mxu0
      %v437 = vadd.f32 0.0, %v436
      %v438 = vpop.f32.mrb[0].mxu0
      %v439 = vpop.f32.mrb[0].mxu0
      %v440 = vadd.f32 0.0, %v439
      %v441 = vpop.f32.mrb[0].mxu0
      %442 = vmatprep.mubr.bf16.mxu0 0
      %443 = vmatmul.mubr.bf16.gmra.mrb[0].mxu0 %v344
      %v444 = vpop.f32.mrb[0].mxu0
      %v445 = vadd.f32 0.0, %v444
      %v446 = vpop.f32.mrb[0].mxu0
      %v447 = vpop.f32.mrb[0].mxu0
      %v448 = vadd.f32 0.0, %v447
      %v449 = vpop.f32.mrb[0].mxu0
      %450 = vmatprep.mubr.bf16.mxu0 0
      %451 = vmatmul.mubr.bf16.gmra.mrb[0].mxu0 %v347
      %v452 = vpop.f32.mrb[0].mxu0
      %v453 = vadd.f32 0.0, %v452
      %v454 = vpop.f32.mrb[0].mxu0
      %v455 = vpop.f32.mrb[0].mxu0
      %v456 = vadd.f32 0.0, %v455
      %v457 = vpop.f32.mrb[0].mxu0
      %458 = vmatprep.mubr.bf16.mxu0 0
      %459 = vmatmul.mubr.bf16.gmra.mrb[0].mxu0 %v350
      %v460 = vpop.f32.mrb[0].mxu0
      %v461 = vadd.f32 0.0, %v460
      %v462 = vpop.f32.mrb[0].mxu0
      %v463 = vpop.f32.mrb[0].mxu0
      %v464 = vadd.f32 0.0, %v463
      %v465 = vpop.f32.mrb[0].mxu0
      %466 = vmatprep.mubr.bf16.mxu0 0
      %467 = vmatmul.mubr.bf16.gmra.mrb[0].mxu0 %v353
      %v468 = vpop.f32.mrb[0].mxu0
      %v469 = vadd.f32 0.0, %v468
      %v470 = vpop.f32.mrb[0].mxu0
      %v471 = vpop.f32.mrb[0].mxu0
      %v472 = vadd.f32 0.0, %v471
      %v473 = vpop.f32.mrb[0].mxu0
      %474 = vmatprep.mubr.bf16.mxu0 0
      %475 = vmatmul.mubr.bf16.gmra.mrb[0].mxu0 %v356
      %v476 = vpop.f32.mrb[0].mxu0
      %v477 = vadd.f32 0.0, %v476
      %v478 = vpop.f32.mrb[0].mxu0
      %v479 = vpop.f32.mrb[0].mxu0
      %v480 = vadd.f32 0.0, %v479
      %v481 = vpop.f32.mrb[0].mxu0
      %482 = vmatprep.mubr.bf16.mxu0 0
      %483 = vmatmul.mubr.bf16.gmra.mrb[0].mxu0 %v359
      %v484 = vpop.f32.mrb[0].mxu0
      %v485 = vadd.f32 0.0, %v484
      %v486 = vpop.f32.mrb[0].mxu0
      %v487 = vpop.f32.mrb[0].mxu0
      %v488 = vadd.f32 0.0, %v487
      %v489 = vpop.f32.mrb[0].mxu0
      %490 = vmatprep.mubr.bf16.mxu0 0
      %491 = vmatmul.mubr.bf16.gmra.mrb[0].mxu0 %v362
      %v492 = vpop.f32.mrb[0].mxu0
      %v493 = vadd.f32 0.0, %v492
      %v494 = vpop.f32.mrb[0].mxu0
      %v495 = vpop.f32.mrb[0].mxu0
      %v496 = vadd.f32 0.0, %v495
      %v497 = vpop.f32.mrb[0].mxu0
      %498 = vmatprep.mubr.bf16.mxu0 0
      %499 = vmatmul.mubr.bf16.gmra.mrb[0].mxu0 %v365
      %v500 = vpop.f32.mrb[0].mxu0
      %v501 = vadd.f32 0.0, %v500
      %v502 = vpop.f32.mrb[0].mxu0
      %v503 = vpop.f32.mrb[0].mxu0
      %v504 = vadd.f32 0.0, %v503
      %v505 = vpop.f32.mrb[0].mxu0
      %506 = vmatprep.mubr.bf16.mxu0 0
      %507 = vmatmul.mubr.bf16.gmra.mrb[0].mxu0 %v368
      %v508 = vpop.f32.mrb[0].mxu0
      %v509 = vadd.f32 0.0, %v508
      %v510 = vpop.f32.mrb[0].mxu0
      %v511 = vpop.f32.mrb[0].mxu0
      %v512 = vadd.f32 0.0, %v511
      %v513 = vpop.f32.mrb[0].mxu0
      %514 = vmatprep.mubr.bf16.mxu0 0
      %515 = vmatmul.mubr.bf16.gmra.mrb[0].mxu0 %v371
      %v516 = vpop.f32.mrb[0].mxu0
      %v517 = vadd.f32 0.0, %v516
      %v518 = vpop.f32.mrb[0].mxu0
      %v519 = vpop.f32.mrb[0].mxu0
      %v520 = vadd.f32 0.0, %v519
      %v521 = vpop.f32.mrb[0].mxu0
      %522 = vmatprep.mubr.bf16.mxu0 0
      %523 = vmatmul.mubr.bf16.gmra.mrb[0].mxu0 %v374
      %v524 = vpop.f32.mrb[0].mxu0
      %v525 = vadd.f32 0.0, %v524
      %v526 = vpop.f32.mrb[0].mxu0
      %v527 = vpop.f32.mrb[0].mxu0
      %v528 = vadd.f32 0.0, %v527
      %v529 = vpop.f32.mrb[0].mxu0
      %530 = vmatprep.mubr.bf16.mxu0 0
      %531 = vmatmul.mubr.bf16.gmra.mrb[0].mxu0 %v377
      %v532 = vpop.f32.mrb[0].mxu0
      %v533 = vadd.f32 0.0, %v532
      %v534 = vpop.f32.mrb[0].mxu0
      %v535 = vpop.f32.mrb[0].mxu0
      %v536 = vadd.f32 0.0, %v535
      %v537 = vpop.f32.mrb[0].mxu0
      %538 = vmatprep.mubr.bf16.mxu0 0
      %539 = vmatmul.mubr.bf16.gmra.mrb[0].mxu0 %v380
      %v540 = vpop.f32.mrb[0].mxu0
      %v541 = vadd.f32 0.0, %v540
      %v542 = vpop.f32.mrb[0].mxu0
      %v543 = vpop.f32.mrb[0].mxu0
      %v544 = vadd.f32 0.0, %v543
      %v545 = vpop.f32.mrb[0].mxu0
      %546 = vdwg.mxu0
      %547 = vst [vmem:[#allocation2] sm:$0xff] %v421
      %548 = vst [vmem:[#allocation2 + $0x8] sm:$0xff] %v424
      %549 = vst [vmem:[#allocation2 + $0x10] sm:$0xff] %v429
      %550 = vst [vmem:[#allocation2 + $0x18] sm:$0xff] %v432
      %551 = vst [vmem:[#allocation2 + $0x20] sm:$0xff] %v437
      %552 = vst [vmem:[#allocation2 + $0x28] sm:$0xff] %v440
      %553 = vst [vmem:[#allocation2 + $0x30] sm:$0xff] %v445
      %554 = vst [vmem:[#allocation2 + $0x38] sm:$0xff] %v448
      %555 = vst [vmem:[#allocation2 + $0x40] sm:$0xff] %v453
      %556 = vst [vmem:[#allocation2 + $0x48] sm:$0xff] %v456
      %557 = vst [vmem:[#allocation2 + $0x50] sm:$0xff] %v461
      %558 = vst [vmem:[#allocation2 + $0x58] sm:$0xff] %v464
      %559 = vst [vmem:[#allocation2 + $0x60] sm:$0xff] %v469
      %560 = vst [vmem:[#allocation2 + $0x68] sm:$0xff] %v472
      %561 = vst [vmem:[#allocation2 + $0x70] sm:$0xff] %v477
      %562 = vst [vmem:[#allocation2 + $0x78] sm:$0xff] %v480
      %563 = vst [vmem:[#allocation2 + $0x80] sm:$0xff] %v485
      %564 = vst [vmem:[#allocation2 + $0x88] sm:$0xff] %v488
      %565 = vst [vmem:[#allocation2 + $0x90] sm:$0xff] %v493
      %566 = vst [vmem:[#allocation2 + $0x98] sm:$0xff] %v496
      %567 = vst [vmem:[#allocation2 + $0xa0] sm:$0xff] %v501
      %568 = vst [vmem:[#allocation2 + $0xa8] sm:$0xff] %v504
      %569 = vst [vmem:[#allocation2 + $0xb0] sm:$0xff] %v509
      %570 = vst [vmem:[#allocation2 + $0xb8] sm:$0xff] %v512
      %571 = vst [vmem:[#allocation2 + $0xc0] sm:$0xff] %v517
      %572 = vst [vmem:[#allocation2 + $0xc8] sm:$0xff] %v520
      %573 = vst [vmem:[#allocation2 + $0xd0] sm:$0xff] %v525
      %574 = vst [vmem:[#allocation2 + $0xd8] sm:$0xff] %v528
      %575 = vst [vmem:[#allocation2 + $0xe0] sm:$0xff] %v533
      %576 = vst [vmem:[#allocation2 + $0xe8] sm:$0xff] %v536
      %577 = vst [vmem:[#allocation2 + $0xf0] sm:$0xff] %v541
      %578 = vst [vmem:[#allocation2 + $0xf8] sm:$0xff] %v544
      %s579 = sadd.s32 %s205, 1
      %s580 = smul.u32 %s579, 2
      %s581 = smul.addr %s580, 4
      %s582 = scalar_lea.vmem %s190, %s581
      %v583 = vld [vmem:[%s582] sm:$0xf]
      %v584 = vld [vmem:[%s582 + $0x4] sm:$0xf]
      %v585 = vld [vmem:[%s582 + $0x8] sm:$0xf]
      %v586 = vld [vmem:[%s582 + $0xc] sm:$0xf]
      %v587 = vld [vmem:[%s582 + $0x10] sm:$0xf]
      %v588 = vld [vmem:[%s582 + $0x14] sm:$0xf]
      %v589 = vld [vmem:[%s582 + $0x18] sm:$0xf]
      %v590 = vld [vmem:[%s582 + $0x1c] sm:$0xf]
      %v591 = vld [vmem:[%s582 + $0x20] sm:$0xf]
      %v592 = vld [vmem:[%s582 + $0x24] sm:$0xf]
      %v593 = vld [vmem:[%s582 + $0x28] sm:$0xf]
      %v594 = vld [vmem:[%s582 + $0x2c] sm:$0xf]
      %v595 = vld [vmem:[%s582 + $0x30] sm:$0xf]
      %v596 = vld [vmem:[%s582 + $0x34] sm:$0xf]
      %v597 = vld [vmem:[%s582 + $0x38] sm:$0xf]
      %v598 = vld [vmem:[%s582 + $0x3c] sm:$0xf]
      %v599 = vld [vmem:[%s582 + $0x40] sm:$0xf]
      %v600 = vld [vmem:[%s582 + $0x44] sm:$0xf]
      %v601 = vld [vmem:[%s582 + $0x48] sm:$0xf]
      %v602 = vld [vmem:[%s582 + $0x4c] sm:$0xf]
      %v603 = vld [vmem:[%s582 + $0x50] sm:$0xf]
      %v604 = vld [vmem:[%s582 + $0x54] sm:$0xf]
      %v605 = vld [vmem:[%s582 + $0x58] sm:$0xf]
      %v606 = vld [vmem:[%s582 + $0x5c] sm:$0xf]
      %v607 = vld [vmem:[%s582 + $0x60] sm:$0xf]
      %v608 = vld [vmem:[%s582 + $0x64] sm:$0xf]
      %v609 = vld [vmem:[%s582 + $0x68] sm:$0xf]
      %v610 = vld [vmem:[%s582 + $0x6c] sm:$0xf]
      %v611 = vld [vmem:[%s582 + $0x70] sm:$0xf]
      %v612 = vld [vmem:[%s582 + $0x74] sm:$0xf]
      %v613 = vld [vmem:[%s582 + $0x78] sm:$0xf]
      %v614 = vld [vmem:[%s582 + $0x7c] sm:$0xf]
      %s615 = scalar_lea.vmem %s1, 12
      %v616 = vld [vmem:[%s615] sm:$0xf]
      %v617 = vld [vmem:[%s615 + $0x4] sm:$0xf]
      %v618 = vld [vmem:[%s615 + $0x8] sm:$0xf]
      %v651 = vunpack.c.l.b16 %v583
      %v652 = vunpack.c.l.b16 %v584
      %v653 = vunpack.c.l.b16 %v585
      %v654 = vunpack.c.l.b16 %v586
      %v655 = vunpack.c.l.b16 %v587
      %v656 = vunpack.c.l.b16 %v588
      %v657 = vunpack.c.l.b16 %v589
      %v658 = vunpack.c.l.b16 %v590
      %v659 = vunpack.c.l.b16 %v591
      %v660 = vunpack.c.l.b16 %v592
      %v661 = vunpack.c.l.b16 %v593
      %v662 = vunpack.c.l.b16 %v594
      %v663 = vunpack.c.l.b16 %v595
      %v664 = vunpack.c.l.b16 %v596
      %v665 = vunpack.c.l.b16 %v597
      %v666 = vunpack.c.l.b16 %v598
      %v667 = vunpack.c.l.b16 %v599
      %v668 = vunpack.c.l.b16 %v600
      %v669 = vunpack.c.l.b16 %v601
      %v670 = vunpack.c.l.b16 %v602
      %v671 = vunpack.c.l.b16 %v603
      %v672 = vunpack.c.l.b16 %v604
      %v673 = vunpack.c.l.b16 %v605
      %v674 = vunpack.c.l.b16 %v606
      %v675 = vunpack.c.l.b16 %v607
      %v676 = vunpack.c.l.b16 %v608
      %v677 = vunpack.c.l.b16 %v609
      %v678 = vunpack.c.l.b16 %v610
      %v679 = vunpack.c.l.b16 %v611
      %v680 = vunpack.c.l.b16 %v612
      %v681 = vunpack.c.l.b16 %v613
      %v682 = vunpack.c.l.b16 %v614
      %v683 = vpack.c.b16 %v652, %v651
      %v684 = vpack.c.b16 %v654, %v653
      %v685 = vpack.c.b16 %v656, %v655
      %v686 = vpack.c.b16 %v658, %v657
      %v687 = vpack.c.b16 %v660, %v659
      %v688 = vpack.c.b16 %v662, %v661
      %v689 = vpack.c.b16 %v664, %v663
      %v690 = vpack.c.b16 %v666, %v665
      %v691 = vpack.c.b16 %v668, %v667
      %v692 = vpack.c.b16 %v670, %v669
      %v693 = vpack.c.b16 %v672, %v671
      %v694 = vpack.c.b16 %v674, %v673
      %v695 = vpack.c.b16 %v676, %v675
      %v696 = vpack.c.b16 %v678, %v677
      %v697 = vpack.c.b16 %v680, %v679
      %v698 = vpack.c.b16 %v682, %v681
      %v702 = vunpack.c.l.b16 %v616
      %v703 = vunpack.c.l.b16 %v617
      %v704 = vunpack.c.l.b16 %v618
      %v705 = vpack.c.b16 %v703, %v702
      %v706 = vpack.c.b16 %v704, %v704
      %v709 = vsel %vm333, %v683, 0
      %v712 = vsel %vm333, %v684, 0
      %v715 = vsel %vm333, %v685, 0
      %v718 = vsel %vm333, %v686, 0
      %v721 = vsel %vm333, %v687, 0
      %v724 = vsel %vm333, %v688, 0
      %v727 = vsel %vm333, %v689, 0
      %v730 = vsel %vm333, %v690, 0
      %v733 = vsel %vm333, %v691, 0
      %v736 = vsel %vm333, %v692, 0
      %v739 = vsel %vm333, %v693, 0
      %v742 = vsel %vm333, %v694, 0
      %v745 = vsel %vm333, %v695, 0
      %v748 = vsel %vm333, %v696, 0
      %v751 = vsel %vm333, %v697, 0
      %v754 = vsel %vm333, %v698, 0
      %v757 = vsel %vm382, %v706, 0
      %759 = vmatprep.subr.bf16.mxu0 0
      %760 = vmatpush1.bf16.msra.mxu0 %v705
      %761 = vmatprep.subr.bf16.mxu0 0
      %762 = vmatpush1.bf16.msra.mxu0 %v757
      %763 = vmatprep.subr.bf16.mxu0 0
      %764 = vmatpush1.bf16.msra.mxu0 0
      %765 = vmatprep.subr.bf16.mxu0 0
      %766 = vmatpush1.bf16.msra.mxu0 0
      %767 = vmatprep.subr.bf16.mxu0 0
      %768 = vmatpush1.bf16.msra.mxu0 0
      %769 = vmatprep.subr.bf16.mxu0 0
      %770 = vmatpush1.bf16.msra.mxu0 0
      %771 = vmatprep.subr.bf16.mxu0 0
      %772 = vmatpush1.bf16.msra.mxu0 0
      %773 = vmatprep.subr.bf16.mxu0 0
      %774 = vmatpush1.bf16.msra.mxu0 0
      %775 = vmatprep.subr.bf16.mxu0 0
      %776 = vmatpush1.bf16.msra.mxu0 0
      %777 = vmatprep.subr.bf16.mxu0 0
      %778 = vmatpush1.bf16.msra.mxu0 0
      %779 = vmatprep.subr.bf16.mxu0 0
      %780 = vmatpush1.bf16.msra.mxu0 0
      %781 = vmatprep.subr.bf16.mxu0 0
      %782 = vmatpush1.bf16.msra.mxu0 0
      %783 = vmatprep.subr.bf16.mxu0 0
      %784 = vmatpush1.bf16.msra.mxu0 0
      %785 = vmatprep.subr.bf16.mxu0 0
      %786 = vmatpush1.bf16.msra.mxu0 0
      %787 = vmatprep.subr.bf16.mxu0 0
      %788 = vmatpush1.bf16.msra.mxu0 0
      %789 = vmatprep.subr.bf16.mxu0 0
      %790 = vmatpush1.bf16.msra.mxu0 0
      %791 = vmatprep.mubr.bf16.mxu0 0
      %792 = vmatmul.mubr.bf16.gmra.mrb[0].mxu0 %v709
      %v793 = vpop.f32.mrb[0].mxu0
      %v794 = vadd.f32 0.0, %v793
      %v795 = vpop.f32.mrb[0].mxu0
      %v796 = vpop.f32.mrb[0].mxu0
      %v797 = vadd.f32 0.0, %v796
      %v798 = vpop.f32.mrb[0].mxu0
      %799 = vmatprep.mubr.bf16.mxu0 0
      %800 = vmatmul.mubr.bf16.gmra.mrb[0].mxu0 %v712
      %v801 = vpop.f32.mrb[0].mxu0
      %v802 = vadd.f32 0.0, %v801
      %v803 = vpop.f32.mrb[0].mxu0
      %v804 = vpop.f32.mrb[0].mxu0
      %v805 = vadd.f32 0.0, %v804
      %v806 = vpop.f32.mrb[0].mxu0
      %807 = vmatprep.mubr.bf16.mxu0 0
      %808 = vmatmul.mubr.bf16.gmra.mrb[0].mxu0 %v715
      %v809 = vpop.f32.mrb[0].mxu0
      %v810 = vadd.f32 0.0, %v809
      %v811 = vpop.f32.mrb[0].mxu0
      %v812 = vpop.f32.mrb[0].mxu0
      %v813 = vadd.f32 0.0, %v812
      %v814 = vpop.f32.mrb[0].mxu0
      %815 = vmatprep.mubr.bf16.mxu0 0
      %816 = vmatmul.mubr.bf16.gmra.mrb[0].mxu0 %v718
      %v817 = vpop.f32.mrb[0].mxu0
      %v818 = vadd.f32 0.0, %v817
      %v819 = vpop.f32.mrb[0].mxu0
      %v820 = vpop.f32.mrb[0].mxu0
      %v821 = vadd.f32 0.0, %v820
      %v822 = vpop.f32.mrb[0].mxu0
      %823 = vmatprep.mubr.bf16.mxu0 0
      %824 = vmatmul.mubr.bf16.gmra.mrb[0].mxu0 %v721
      %v825 = vpop.f32.mrb[0].mxu0
      %v826 = vadd.f32 0.0, %v825
      %v827 = vpop.f32.mrb[0].mxu0
      %v828 = vpop.f32.mrb[0].mxu0
      %v829 = vadd.f32 0.0, %v828
      %v830 = vpop.f32.mrb[0].mxu0
      %831 = vmatprep.mubr.bf16.mxu0 0
      %832 = vmatmul.mubr.bf16.gmra.mrb[0].mxu0 %v724
      %v833 = vpop.f32.mrb[0].mxu0
      %v834 = vadd.f32 0.0, %v833
      %v835 = vpop.f32.mrb[0].mxu0
      %v836 = vpop.f32.mrb[0].mxu0
      %v837 = vadd.f32 0.0, %v836
      %v838 = vpop.f32.mrb[0].mxu0
      %839 = vmatprep.mubr.bf16.mxu0 0
      %840 = vmatmul.mubr.bf16.gmra.mrb[0].mxu0 %v727
      %v841 = vpop.f32.mrb[0].mxu0
      %v842 = vadd.f32 0.0, %v841
      %v843 = vpop.f32.mrb[0].mxu0
      %v844 = vpop.f32.mrb[0].mxu0
      %v845 = vadd.f32 0.0, %v844
      %v846 = vpop.f32.mrb[0].mxu0
      %847 = vmatprep.mubr.bf16.mxu0 0
      %848 = vmatmul.mubr.bf16.gmra.mrb[0].mxu0 %v730
      %v849 = vpop.f32.mrb[0].mxu0
      %v850 = vadd.f32 0.0, %v849
      %v851 = vpop.f32.mrb[0].mxu0
      %v852 = vpop.f32.mrb[0].mxu0
      %v853 = vadd.f32 0.0, %v852
      %v854 = vpop.f32.mrb[0].mxu0
      %855 = vmatprep.mubr.bf16.mxu0 0
      %856 = vmatmul.mubr.bf16.gmra.mrb[0].mxu0 %v733
      %v857 = vpop.f32.mrb[0].mxu0
      %v858 = vadd.f32 0.0, %v857
      %v859 = vpop.f32.mrb[0].mxu0
      %v860 = vpop.f32.mrb[0].mxu0
      %v861 = vadd.f32 0.0, %v860
      %v862 = vpop.f32.mrb[0].mxu0
      %863 = vmatprep.mubr.bf16.mxu0 0
      %864 = vmatmul.mubr.bf16.gmra.mrb[0].mxu0 %v736
      %v865 = vpop.f32.mrb[0].mxu0
      %v866 = vadd.f32 0.0, %v865
      %v867 = vpop.f32.mrb[0].mxu0
      %v868 = vpop.f32.mrb[0].mxu0
      %v869 = vadd.f32 0.0, %v868
      %v870 = vpop.f32.mrb[0].mxu0
      %871 = vmatprep.mubr.bf16.mxu0 0
      %872 = vmatmul.mubr.bf16.gmra.mrb[0].mxu0 %v739
      %v873 = vpop.f32.mrb[0].mxu0
      %v874 = vadd.f32 0.0, %v873
      %v875 = vpop.f32.mrb[0].mxu0
      %v876 = vpop.f32.mrb[0].mxu0
      %v877 = vadd.f32 0.0, %v876
      %v878 = vpop.f32.mrb[0].mxu0
      %879 = vmatprep.mubr.bf16.mxu0 0
      %880 = vmatmul.mubr.bf16.gmra.mrb[0].mxu0 %v742
      %v881 = vpop.f32.mrb[0].mxu0
      %v882 = vadd.f32 0.0, %v881
      %v883 = vpop.f32.mrb[0].mxu0
      %v884 = vpop.f32.mrb[0].mxu0
      %v885 = vadd.f32 0.0, %v884
      %v886 = vpop.f32.mrb[0].mxu0
      %887 = vmatprep.mubr.bf16.mxu0 0
      %888 = vmatmul.mubr.bf16.gmra.mrb[0].mxu0 %v745
      %v889 = vpop.f32.mrb[0].mxu0
      %v890 = vadd.f32 0.0, %v889
      %v891 = vpop.f32.mrb[0].mxu0
      %v892 = vpop.f32.mrb[0].mxu0
      %v893 = vadd.f32 0.0, %v892
      %v894 = vpop.f32.mrb[0].mxu0
      %895 = vmatprep.mubr.bf16.mxu0 0
      %896 = vmatmul.mubr.bf16.gmra.mrb[0].mxu0 %v748
      %v897 = vpop.f32.mrb[0].mxu0
      %v898 = vadd.f32 0.0, %v897
      %v899 = vpop.f32.mrb[0].mxu0
      %v900 = vpop.f32.mrb[0].mxu0
      %v901 = vadd.f32 0.0, %v900
      %v902 = vpop.f32.mrb[0].mxu0
      %903 = vmatprep.mubr.bf16.mxu0 0
      %904 = vmatmul.mubr.bf16.gmra.mrb[0].mxu0 %v751
      %v905 = vpop.f32.mrb[0].mxu0
      %v906 = vadd.f32 0.0, %v905
      %v907 = vpop.f32.mrb[0].mxu0
      %v908 = vpop.f32.mrb[0].mxu0
      %v909 = vadd.f32 0.0, %v908
      %v910 = vpop.f32.mrb[0].mxu0
      %911 = vmatprep.mubr.bf16.mxu0 0
      %912 = vmatmul.mubr.bf16.gmra.mrb[0].mxu0 %v754
      %v913 = vpop.f32.mrb[0].mxu0
      %v914 = vadd.f32 0.0, %v913
      %v915 = vpop.f32.mrb[0].mxu0
      %v916 = vpop.f32.mrb[0].mxu0
      %v917 = vadd.f32 0.0, %v916
      %v918 = vpop.f32.mrb[0].mxu0
      %919 = vdwg.mxu0
      %v920 = vld [vmem:[#allocation2] sm:$0xff]
      %v921 = vld [vmem:[#allocation2 + $0x8] sm:$0xff]
      %v922 = vld [vmem:[#allocation2 + $0x10] sm:$0xff]
      %v923 = vld [vmem:[#allocation2 + $0x18] sm:$0xff]
      %v924 = vld [vmem:[#allocation2 + $0x20] sm:$0xff]
      %v925 = vld [vmem:[#allocation2 + $0x28] sm:$0xff]
      %v926 = vld [vmem:[#allocation2 + $0x30] sm:$0xff]
      %v927 = vld [vmem:[#allocation2 + $0x38] sm:$0xff]
      %v928 = vld [vmem:[#allocation2 + $0x40] sm:$0xff]
      %v929 = vld [vmem:[#allocation2 + $0x48] sm:$0xff]
      %v930 = vld [vmem:[#allocation2 + $0x50] sm:$0xff]
      %v931 = vld [vmem:[#allocation2 + $0x58] sm:$0xff]
      %v932 = vld [vmem:[#allocation2 + $0x60] sm:$0xff]
      %v933 = vld [vmem:[#allocation2 + $0x68] sm:$0xff]
      %v934 = vld [vmem:[#allocation2 + $0x70] sm:$0xff]
      %v935 = vld [vmem:[#allocation2 + $0x78] sm:$0xff]
      %v936 = vld [vmem:[#allocation2 + $0x80] sm:$0xff]
      %v937 = vld [vmem:[#allocation2 + $0x88] sm:$0xff]
      %v938 = vld [vmem:[#allocation2 + $0x90] sm:$0xff]
      %v939 = vld [vmem:[#allocation2 + $0x98] sm:$0xff]
      %v940 = vld [vmem:[#allocation2 + $0xa0] sm:$0xff]
      %v941 = vld [vmem:[#allocation2 + $0xa8] sm:$0xff]
      %v942 = vld [vmem:[#allocation2 + $0xb0] sm:$0xff]
      %v943 = vld [vmem:[#allocation2 + $0xb8] sm:$0xff]
      %v944 = vld [vmem:[#allocation2 + $0xc0] sm:$0xff]
      %v945 = vld [vmem:[#allocation2 + $0xc8] sm:$0xff]
      %v946 = vld [vmem:[#allocation2 + $0xd0] sm:$0xff]
      %v947 = vld [vmem:[#allocation2 + $0xd8] sm:$0xff]
      %v948 = vld [vmem:[#allocation2 + $0xe0] sm:$0xff]
      %v949 = vld [vmem:[#allocation2 + $0xe8] sm:$0xff]
      %v950 = vld [vmem:[#allocation2 + $0xf0] sm:$0xff]
      %v951 = vld [vmem:[#allocation2 + $0xf8] sm:$0xff]
      %v952 = vadd.f32 %v920, %v794
      %v953 = vadd.f32 %v921, %v797
      %v954 = vadd.f32 %v922, %v802
      %v955 = vadd.f32 %v923, %v805
      %v956 = vadd.f32 %v924, %v810
      %v957 = vadd.f32 %v925, %v813
      %v958 = vadd.f32 %v926, %v818
      %v959 = vadd.f32 %v927, %v821
      %v960 = vadd.f32 %v928, %v826
      %v961 = vadd.f32 %v929, %v829
      %v962 = vadd.f32 %v930, %v834
      %v963 = vadd.f32 %v931, %v837
      %v964 = vadd.f32 %v932, %v842
      %v965 = vadd.f32 %v933, %v845
      %v966 = vadd.f32 %v934, %v850
      %v967 = vadd.f32 %v935, %v853
      %v968 = vadd.f32 %v936, %v858
      %v969 = vadd.f32 %v937, %v861
      %v970 = vadd.f32 %v938, %v866
      %v971 = vadd.f32 %v939, %v869
      %v972 = vadd.f32 %v940, %v874
      %v973 = vadd.f32 %v941, %v877
      %v974 = vadd.f32 %v942, %v882
      %v975 = vadd.f32 %v943, %v885
      %v976 = vadd.f32 %v944, %v890
      %v977 = vadd.f32 %v945, %v893
      %v978 = vadd.f32 %v946, %v898
      %v979 = vadd.f32 %v947, %v901
      %v980 = vadd.f32 %v948, %v906
      %v981 = vadd.f32 %v949, %v909
      %v982 = vadd.f32 %v950, %v914
      %v983 = vadd.f32 %v951, %v917
      %984 = vst [vmem:[#allocation2] sm:$0xff] %v952
      %985 = vst [vmem:[#allocation2 + $0x8] sm:$0xff] %v953
      %986 = vst [vmem:[#allocation2 + $0x10] sm:$0xff] %v954
      %987 = vst [vmem:[#allocation2 + $0x18] sm:$0xff] %v955
      %988 = vst [vmem:[#allocation2 + $0x20] sm:$0xff] %v956
      %989 = vst [vmem:[#allocation2 + $0x28] sm:$0xff] %v957
      %990 = vst [vmem:[#allocation2 + $0x30] sm:$0xff] %v958
      %991 = vst [vmem:[#allocation2 + $0x38] sm:$0xff] %v959
      %992 = vst [vmem:[#allocation2 + $0x40] sm:$0xff] %v960
      %993 = vst [vmem:[#allocation2 + $0x48] sm:$0xff] %v961
      %994 = vst [vmem:[#allocation2 + $0x50] sm:$0xff] %v962
      %995 = vst [vmem:[#allocation2 + $0x58] sm:$0xff] %v963
      %996 = vst [vmem:[#allocation2 + $0x60] sm:$0xff] %v964
      %997 = vst [vmem:[#allocation2 + $0x68] sm:$0xff] %v965
      %998 = vst [vmem:[#allocation2 + $0x70] sm:$0xff] %v966
      %999 = vst [vmem:[#allocation2 + $0x78] sm:$0xff] %v967
      %1000 = vst [vmem:[#allocation2 + $0x80] sm:$0xff] %v968
      %1001 = vst [vmem:[#allocation2 + $0x88] sm:$0xff] %v969
      %1002 = vst [vmem:[#allocation2 + $0x90] sm:$0xff] %v970
      %1003 = vst [vmem:[#allocation2 + $0x98] sm:$0xff] %v971
      %1004 = vst [vmem:[#allocation2 + $0xa0] sm:$0xff] %v972
      %1005 = vst [vmem:[#allocation2 + $0xa8] sm:$0xff] %v973
      %1006 = vst [vmem:[#allocation2 + $0xb0] sm:$0xff] %v974
      %1007 = vst [vmem:[#allocation2 + $0xb8] sm:$0xff] %v975
      %1008 = vst [vmem:[#allocation2 + $0xc0] sm:$0xff] %v976
      %1009 = vst [vmem:[#allocation2 + $0xc8] sm:$0xff] %v977
      %1010 = vst [vmem:[#allocation2 + $0xd0] sm:$0xff] %v978
      %1011 = vst [vmem:[#allocation2 + $0xd8] sm:$0xff] %v979
      %1012 = vst [vmem:[#allocation2 + $0xe0] sm:$0xff] %v980
      %1013 = vst [vmem:[#allocation2 + $0xe8] sm:$0xff] %v981
      %1014 = vst [vmem:[#allocation2 + $0xf0] sm:$0xff] %v982
      %1015 = vst [vmem:[#allocation2 + $0xf8] sm:$0xff] %v983
      %s1016 = sadd.s32 %s205, 2
      %s1017 = smul.u32 %s1016, 2
      %s1018 = smul.addr %s1017, 4
      %s1019 = scalar_lea.vmem %s190, %s1018
      %v1020 = vld [vmem:[%s1019] sm:$0xf]
      %v1021 = vld [vmem:[%s1019 + $0x4] sm:$0xf]
      %v1022 = vld [vmem:[%s1019 + $0x8] sm:$0xf]
      %v1023 = vld [vmem:[%s1019 + $0xc] sm:$0xf]
      %v1024 = vld [vmem:[%s1019 + $0x10] sm:$0xf]
      %v1025 = vld [vmem:[%s1019 + $0x14] sm:$0xf]
      %v1026 = vld [vmem:[%s1019 + $0x18] sm:$0xf]
      %v1027 = vld [vmem:[%s1019 + $0x1c] sm:$0xf]
      %v1028 = vld [vmem:[%s1019 + $0x20] sm:$0xf]
      %v1029 = vld [vmem:[%s1019 + $0x24] sm:$0xf]
      %v1030 = vld [vmem:[%s1019 + $0x28] sm:$0xf]
      %v1031 = vld [vmem:[%s1019 + $0x2c] sm:$0xf]
      %v1032 = vld [vmem:[%s1019 + $0x30] sm:$0xf]
      %v1033 = vld [vmem:[%s1019 + $0x34] sm:$0xf]
      %v1034 = vld [vmem:[%s1019 + $0x38] sm:$0xf]
      %v1035 = vld [vmem:[%s1019 + $0x3c] sm:$0xf]
      %v1036 = vld [vmem:[%s1019 + $0x40] sm:$0xf]
      %v1037 = vld [vmem:[%s1019 + $0x44] sm:$0xf]
      %v1038 = vld [vmem:[%s1019 + $0x48] sm:$0xf]
      %v1039 = vld [vmem:[%s1019 + $0x4c] sm:$0xf]
      %v1040 = vld [vmem:[%s1019 + $0x50] sm:$0xf]
      %v1041 = vld [vmem:[%s1019 + $0x54] sm:$0xf]
      %v1042 = vld [vmem:[%s1019 + $0x58] sm:$0xf]
      %v1043 = vld [vmem:[%s1019 + $0x5c] sm:$0xf]
      %v1044 = vld [vmem:[%s1019 + $0x60] sm:$0xf]
      %v1045 = vld [vmem:[%s1019 + $0x64] sm:$0xf]
      %v1046 = vld [vmem:[%s1019 + $0x68] sm:$0xf]
      %v1047 = vld [vmem:[%s1019 + $0x6c] sm:$0xf]
      %v1048 = vld [vmem:[%s1019 + $0x70] sm:$0xf]
      %v1049 = vld [vmem:[%s1019 + $0x74] sm:$0xf]
      %v1050 = vld [vmem:[%s1019 + $0x78] sm:$0xf]
      %v1051 = vld [vmem:[%s1019 + $0x7c] sm:$0xf]
      %s1052 = scalar_lea.vmem %s1, 24
      %v1053 = vld [vmem:[%s1052] sm:$0xf]
      %v1054 = vld [vmem:[%s1052 + $0x4] sm:$0xf]
      %v1055 = vld [vmem:[%s1052 + $0x8] sm:$0xf]
      %v1088 = vunpack.c.l.b16 %v1020
      %v1089 = vunpack.c.l.b16 %v1021
      %v1090 = vunpack.c.l.b16 %v1022
      %v1091 = vunpack.c.l.b16 %v1023
      %v1092 = vunpack.c.l.b16 %v1024
      %v1093 = vunpack.c.l.b16 %v1025
      %v1094 = vunpack.c.l.b16 %v1026
      %v1095 = vunpack.c.l.b16 %v1027
      %v1096 = vunpack.c.l.b16 %v1028
      %v1097 = vunpack.c.l.b16 %v1029
      %v1098 = vunpack.c.l.b16 %v1030
      %v1099 = vunpack.c.l.b16 %v1031
      %v1100 = vunpack.c.l.b16 %v1032
      %v1101 = vunpack.c.l.b16 %v1033
      %v1102 = vunpack.c.l.b16 %v1034
      %v1103 = vunpack.c.l.b16 %v1035
      %v1104 = vunpack.c.l.b16 %v1036
      %v1105 = vunpack.c.l.b16 %v1037
      %v1106 = vunpack.c.l.b16 %v1038
      %v1107 = vunpack.c.l.b16 %v1039
      %v1108 = vunpack.c.l.b16 %v1040
      %v1109 = vunpack.c.l.b16 %v1041
      %v1110 = vunpack.c.l.b16 %v1042
      %v1111 = vunpack.c.l.b16 %v1043
      %v1112 = vunpack.c.l.b16 %v1044
      %v1113 = vunpack.c.l.b16 %v1045
      %v1114 = vunpack.c.l.b16 %v1046
      %v1115 = vunpack.c.l.b16 %v1047
      %v1116 = vunpack.c.l.b16 %v1048
      %v1117 = vunpack.c.l.b16 %v1049
      %v1118 = vunpack.c.l.b16 %v1050
      %v1119 = vunpack.c.l.b16 %v1051
      %v1120 = vpack.c.b16 %v1089, %v1088
      %v1121 = vpack.c.b16 %v1091, %v1090
      %v1122 = vpack.c.b16 %v1093, %v1092
      %v1123 = vpack.c.b16 %v1095, %v1094
      %v1124 = vpack.c.b16 %v1097, %v1096
      %v1125 = vpack.c.b16 %v1099, %v1098
      %v1126 = vpack.c.b16 %v1101, %v1100
      %v1127 = vpack.c.b16 %v1103, %v1102
      %v1128 = vpack.c.b16 %v1105, %v1104
      %v1129 = vpack.c.b16 %v1107, %v1106
      %v1130 = vpack.c.b16 %v1109, %v1108
      %v1131 = vpack.c.b16 %v1111, %v1110
      %v1132 = vpack.c.b16 %v1113, %v1112
      %v1133 = vpack.c.b16 %v1115, %v1114
      %v1134 = vpack.c.b16 %v1117, %v1116
      %v1135 = vpack.c.b16 %v1119, %v1118
      %v1139 = vunpack.c.l.b16 %v1053
      %v1140 = vunpack.c.l.b16 %v1054
      %v1141 = vunpack.c.l.b16 %v1055
      %v1142 = vpack.c.b16 %v1140, %v1139
      %v1143 = vpack.c.b16 %v1141, %v1141
      %v1146 = vsel %vm333, %v1120, 0
      %v1149 = vsel %vm333, %v1121, 0
      %v1152 = vsel %vm333, %v1122, 0
      %v1155 = vsel %vm333, %v1123, 0
      %v1158 = vsel %vm333, %v1124, 0
      %v1161 = vsel %vm333, %v1125, 0
      %v1164 = vsel %vm333, %v1126, 0
      %v1167 = vsel %vm333, %v1127, 0
      %v1170 = vsel %vm333, %v1128, 0
      %v1173 = vsel %vm333, %v1129, 0
      %v1176 = vsel %vm333, %v1130, 0
      %v1179 = vsel %vm333, %v1131, 0
      %v1182 = vsel %vm333, %v1132, 0
      %v1185 = vsel %vm333, %v1133, 0
      %v1188 = vsel %vm333, %v1134, 0
      %v1191 = vsel %vm333, %v1135, 0
      %v1194 = vsel %vm382, %v1143, 0
      %1196 = vmatprep.subr.bf16.mxu0 0
      %1197 = vmatpush1.bf16.msra.mxu0 %v1142
      %1198 = vmatprep.subr.bf16.mxu0 0
      %1199 = vmatpush1.bf16.msra.mxu0 %v1194
      %1200 = vmatprep.subr.bf16.mxu0 0
      %1201 = vmatpush1.bf16.msra.mxu0 0
      %1202 = vmatprep.subr.bf16.mxu0 0
      %1203 = vmatpush1.bf16.msra.mxu0 0
      %1204 = vmatprep.subr.bf16.mxu0 0
      %1205 = vmatpush1.bf16.msra.mxu0 0
      %1206 = vmatprep.subr.bf16.mxu0 0
      %1207 = vmatpush1.bf16.msra.mxu0 0
      %1208 = vmatprep.subr.bf16.mxu0 0
      %1209 = vmatpush1.bf16.msra.mxu0 0
      %1210 = vmatprep.subr.bf16.mxu0 0
      %1211 = vmatpush1.bf16.msra.mxu0 0
      %1212 = vmatprep.subr.bf16.mxu0 0
      %1213 = vmatpush1.bf16.msra.mxu0 0
      %1214 = vmatprep.subr.bf16.mxu0 0
      %1215 = vmatpush1.bf16.msra.mxu0 0
      %1216 = vmatprep.subr.bf16.mxu0 0
      %1217 = vmatpush1.bf16.msra.mxu0 0
      %1218 = vmatprep.subr.bf16.mxu0 0
      %1219 = vmatpush1.bf16.msra.mxu0 0
      %1220 = vmatprep.subr.bf16.mxu0 0
      %1221 = vmatpush1.bf16.msra.mxu0 0
      %1222 = vmatprep.subr.bf16.mxu0 0
      %1223 = vmatpush1.bf16.msra.mxu0 0
      %1224 = vmatprep.subr.bf16.mxu0 0
      %1225 = vmatpush1.bf16.msra.mxu0 0
      %1226 = vmatprep.subr.bf16.mxu0 0
      %1227 = vmatpush1.bf16.msra.mxu0 0
      %1228 = vmatprep.mubr.bf16.mxu0 0
      %1229 = vmatmul.mubr.bf16.gmra.mrb[0].mxu0 %v1146
      %v1230 = vpop.f32.mrb[0].mxu0
      %v1231 = vadd.f32 0.0, %v1230
      %v1232 = vpop.f32.mrb[0].mxu0
      %v1233 = vpop.f32.mrb[0].mxu0
      %v1234 = vadd.f32 0.0, %v1233
      %v1235 = vpop.f32.mrb[0].mxu0
      %1236 = vmatprep.mubr.bf16.mxu0 0
      %1237 = vmatmul.mubr.bf16.gmra.mrb[0].mxu0 %v1149
      %v1238 = vpop.f32.mrb[0].mxu0
      %v1239 = vadd.f32 0.0, %v1238
      %v1240 = vpop.f32.mrb[0].mxu0
      %v1241 = vpop.f32.mrb[0].mxu0
      %v1242 = vadd.f32 0.0, %v1241
      %v1243 = vpop.f32.mrb[0].mxu0
      %1244 = vmatprep.mubr.bf16.mxu0 0
      %1245 = vmatmul.mubr.bf16.gmra.mrb[0].mxu0 %v1152
      %v1246 = vpop.f32.mrb[0].mxu0
      %v1247 = vadd.f32 0.0, %v1246
      %v1248 = vpop.f32.mrb[0].mxu0
      %v1249 = vpop.f32.mrb[0].mxu0
      %v1250 = vadd.f32 0.0, %v1249
      %v1251 = vpop.f32.mrb[0].mxu0
      %1252 = vmatprep.mubr.bf16.mxu0 0
      %1253 = vmatmul.mubr.bf16.gmra.mrb[0].mxu0 %v1155
      %v1254 = vpop.f32.mrb[0].mxu0
      %v1255 = vadd.f32 0.0, %v1254
      %v1256 = vpop.f32.mrb[0].mxu0
      %v1257 = vpop.f32.mrb[0].mxu0
      %v1258 = vadd.f32 0.0, %v1257
      %v1259 = vpop.f32.mrb[0].mxu0
      %1260 = vmatprep.mubr.bf16.mxu0 0
      %1261 = vmatmul.mubr.bf16.gmra.mrb[0].mxu0 %v1158
      %v1262 = vpop.f32.mrb[0].mxu0
      %v1263 = vadd.f32 0.0, %v1262
      %v1264 = vpop.f32.mrb[0].mxu0
      %v1265 = vpop.f32.mrb[0].mxu0
      %v1266 = vadd.f32 0.0, %v1265
      %v1267 = vpop.f32.mrb[0].mxu0
      %1268 = vmatprep.mubr.bf16.mxu0 0
      %1269 = vmatmul.mubr.bf16.gmra.mrb[0].mxu0 %v1161
      %v1270 = vpop.f32.mrb[0].mxu0
      %v1271 = vadd.f32 0.0, %v1270
      %v1272 = vpop.f32.mrb[0].mxu0
      %v1273 = vpop.f32.mrb[0].mxu0
      %v1274 = vadd.f32 0.0, %v1273
      %v1275 = vpop.f32.mrb[0].mxu0
      %1276 = vmatprep.mubr.bf16.mxu0 0
      %1277 = vmatmul.mubr.bf16.gmra.mrb[0].mxu0 %v1164
      %v1278 = vpop.f32.mrb[0].mxu0
      %v1279 = vadd.f32 0.0, %v1278
      %v1280 = vpop.f32.mrb[0].mxu0
      %v1281 = vpop.f32.mrb[0].mxu0
      %v1282 = vadd.f32 0.0, %v1281
      %v1283 = vpop.f32.mrb[0].mxu0
      %1284 = vmatprep.mubr.bf16.mxu0 0
      %1285 = vmatmul.mubr.bf16.gmra.mrb[0].mxu0 %v1167
      %v1286 = vpop.f32.mrb[0].mxu0
      %v1287 = vadd.f32 0.0, %v1286
      %v1288 = vpop.f32.mrb[0].mxu0
      %v1289 = vpop.f32.mrb[0].mxu0
      %v1290 = vadd.f32 0.0, %v1289
      %v1291 = vpop.f32.mrb[0].mxu0
      %1292 = vmatprep.mubr.bf16.mxu0 0
      %1293 = vmatmul.mubr.bf16.gmra.mrb[0].mxu0 %v1170
      %v1294 = vpop.f32.mrb[0].mxu0
      %v1295 = vadd.f32 0.0, %v1294
      %v1296 = vpop.f32.mrb[0].mxu0
      %v1297 = vpop.f32.mrb[0].mxu0
      %v1298 = vadd.f32 0.0, %v1297
      %v1299 = vpop.f32.mrb[0].mxu0
      %1300 = vmatprep.mubr.bf16.mxu0 0
      %1301 = vmatmul.mubr.bf16.gmra.mrb[0].mxu0 %v1173
      %v1302 = vpop.f32.mrb[0].mxu0
      %v1303 = vadd.f32 0.0, %v1302
      %v1304 = vpop.f32.mrb[0].mxu0
      %v1305 = vpop.f32.mrb[0].mxu0
      %v1306 = vadd.f32 0.0, %v1305
      %v1307 = vpop.f32.mrb[0].mxu0
      %1308 = vmatprep.mubr.bf16.mxu0 0
      %1309 = vmatmul.mubr.bf16.gmra.mrb[0].mxu0 %v1176
      %v1310 = vpop.f32.mrb[0].mxu0
      %v1311 = vadd.f32 0.0, %v1310
      %v1312 = vpop.f32.mrb[0].mxu0
      %v1313 = vpop.f32.mrb[0].mxu0
      %v1314 = vadd.f32 0.0, %v1313
      %v1315 = vpop.f32.mrb[0].mxu0
      %1316 = vmatprep.mubr.bf16.mxu0 0
      %1317 = vmatmul.mubr.bf16.gmra.mrb[0].mxu0 %v1179
      %v1318 = vpop.f32.mrb[0].mxu0
      %v1319 = vadd.f32 0.0, %v1318
      %v1320 = vpop.f32.mrb[0].mxu0
      %v1321 = vpop.f32.mrb[0].mxu0
      %v1322 = vadd.f32 0.0, %v1321
      %v1323 = vpop.f32.mrb[0].mxu0
      %1324 = vmatprep.mubr.bf16.mxu0 0
      %1325 = vmatmul.mubr.bf16.gmra.mrb[0].mxu0 %v1182
      %v1326 = vpop.f32.mrb[0].mxu0
      %v1327 = vadd.f32 0.0, %v1326
      %v1328 = vpop.f32.mrb[0].mxu0
      %v1329 = vpop.f32.mrb[0].mxu0
      %v1330 = vadd.f32 0.0, %v1329
      %v1331 = vpop.f32.mrb[0].mxu0
      %1332 = vmatprep.mubr.bf16.mxu0 0
      %1333 = vmatmul.mubr.bf16.gmra.mrb[0].mxu0 %v1185
      %v1334 = vpop.f32.mrb[0].mxu0
      %v1335 = vadd.f32 0.0, %v1334
      %v1336 = vpop.f32.mrb[0].mxu0
      %v1337 = vpop.f32.mrb[0].mxu0
      %v1338 = vadd.f32 0.0, %v1337
      %v1339 = vpop.f32.mrb[0].mxu0
      %1340 = vmatprep.mubr.bf16.mxu0 0
      %1341 = vmatmul.mubr.bf16.gmra.mrb[0].mxu0 %v1188
      %v1342 = vpop.f32.mrb[0].mxu0
      %v1343 = vadd.f32 0.0, %v1342
      %v1344 = vpop.f32.mrb[0].mxu0
      %v1345 = vpop.f32.mrb[0].mxu0
      %v1346 = vadd.f32 0.0, %v1345
      %v1347 = vpop.f32.mrb[0].mxu0
      %1348 = vmatprep.mubr.bf16.mxu0 0
      %1349 = vmatmul.mubr.bf16.gmra.mrb[0].mxu0 %v1191
      %v1350 = vpop.f32.mrb[0].mxu0
      %v1351 = vadd.f32 0.0, %v1350
      %v1352 = vpop.f32.mrb[0].mxu0
      %v1353 = vpop.f32.mrb[0].mxu0
      %v1354 = vadd.f32 0.0, %v1353
      %v1355 = vpop.f32.mrb[0].mxu0
      %1356 = vdwg.mxu0
      %v1357 = vld [vmem:[#allocation2] sm:$0xff]
      %v1358 = vld [vmem:[#allocation2 + $0x8] sm:$0xff]
      %v1359 = vld [vmem:[#allocation2 + $0x10] sm:$0xff]
      %v1360 = vld [vmem:[#allocation2 + $0x18] sm:$0xff]
      %v1361 = vld [vmem:[#allocation2 + $0x20] sm:$0xff]
      %v1362 = vld [vmem:[#allocation2 + $0x28] sm:$0xff]
      %v1363 = vld [vmem:[#allocation2 + $0x30] sm:$0xff]
      %v1364 = vld [vmem:[#allocation2 + $0x38] sm:$0xff]
      %v1365 = vld [vmem:[#allocation2 + $0x40] sm:$0xff]
      %v1366 = vld [vmem:[#allocation2 + $0x48] sm:$0xff]
      %v1367 = vld [vmem:[#allocation2 + $0x50] sm:$0xff]
      %v1368 = vld [vmem:[#allocation2 + $0x58] sm:$0xff]
      %v1369 = vld [vmem:[#allocation2 + $0x60] sm:$0xff]
      %v1370 = vld [vmem:[#allocation2 + $0x68] sm:$0xff]
      %v1371 = vld [vmem:[#allocation2 + $0x70] sm:$0xff]
      %v1372 = vld [vmem:[#allocation2 + $0x78] sm:$0xff]
      %v1373 = vld [vmem:[#allocation2 + $0x80] sm:$0xff]
      %v1374 = vld [vmem:[#allocation2 + $0x88] sm:$0xff]
      %v1375 = vld [vmem:[#allocation2 + $0x90] sm:$0xff]
      %v1376 = vld [vmem:[#allocation2 + $0x98] sm:$0xff]
      %v1377 = vld [vmem:[#allocation2 + $0xa0] sm:$0xff]
      %v1378 = vld [vmem:[#allocation2 + $0xa8] sm:$0xff]
      %v1379 = vld [vmem:[#allocation2 + $0xb0] sm:$0xff]
      %v1380 = vld [vmem:[#allocation2 + $0xb8] sm:$0xff]
      %v1381 = vld [vmem:[#allocation2 + $0xc0] sm:$0xff]
      %v1382 = vld [vmem:[#allocation2 + $0xc8] sm:$0xff]
      %v1383 = vld [vmem:[#allocation2 + $0xd0] sm:$0xff]
      %v1384 = vld [vmem:[#allocation2 + $0xd8] sm:$0xff]
      %v1385 = vld [vmem:[#allocation2 + $0xe0] sm:$0xff]
      %v1386 = vld [vmem:[#allocation2 + $0xe8] sm:$0xff]
      %v1387 = vld [vmem:[#allocation2 + $0xf0] sm:$0xff]
      %v1388 = vld [vmem:[#allocation2 + $0xf8] sm:$0xff]
      %v1389 = vadd.f32 %v1357, %v1231
      %v1390 = vadd.f32 %v1358, %v1234
      %v1391 = vadd.f32 %v1359, %v1239
      %v1392 = vadd.f32 %v1360, %v1242
      %v1393 = vadd.f32 %v1361, %v1247
      %v1394 = vadd.f32 %v1362, %v1250
      %v1395 = vadd.f32 %v1363, %v1255
      %v1396 = vadd.f32 %v1364, %v1258
      %v1397 = vadd.f32 %v1365, %v1263
      %v1398 = vadd.f32 %v1366, %v1266
      %v1399 = vadd.f32 %v1367, %v1271
      %v1400 = vadd.f32 %v1368, %v1274
      %v1401 = vadd.f32 %v1369, %v1279
      %v1402 = vadd.f32 %v1370, %v1282
      %v1403 = vadd.f32 %v1371, %v1287
      %v1404 = vadd.f32 %v1372, %v1290
      %v1405 = vadd.f32 %v1373, %v1295
      %v1406 = vadd.f32 %v1374, %v1298
      %v1407 = vadd.f32 %v1375, %v1303
      %v1408 = vadd.f32 %v1376, %v1306
      %v1409 = vadd.f32 %v1377, %v1311
      %v1410 = vadd.f32 %v1378, %v1314
      %v1411 = vadd.f32 %v1379, %v1319
      %v1412 = vadd.f32 %v1380, %v1322
      %v1413 = vadd.f32 %v1381, %v1327
      %v1414 = vadd.f32 %v1382, %v1330
      %v1415 = vadd.f32 %v1383, %v1335
      %v1416 = vadd.f32 %v1384, %v1338
      %v1417 = vadd.f32 %v1385, %v1343
      %v1418 = vadd.f32 %v1386, %v1346
      %v1419 = vadd.f32 %v1387, %v1351
      %v1420 = vadd.f32 %v1388, %v1354
      %1421 = vst [vmem:[#allocation2] sm:$0xff] %v1389
      %1422 = vst [vmem:[#allocation2 + $0x8] sm:$0xff] %v1390
      %1423 = vst [vmem:[#allocation2 + $0x10] sm:$0xff] %v1391
      %1424 = vst [vmem:[#allocation2 + $0x18] sm:$0xff] %v1392
      %1425 = vst [vmem:[#allocation2 + $0x20] sm:$0xff] %v1393
      %1426 = vst [vmem:[#allocation2 + $0x28] sm:$0xff] %v1394
      %1427 = vst [vmem:[#allocation2 + $0x30] sm:$0xff] %v1395
      %1428 = vst [vmem:[#allocation2 + $0x38] sm:$0xff] %v1396
      %1429 = vst [vmem:[#allocation2 + $0x40] sm:$0xff] %v1397
      %1430 = vst [vmem:[#allocation2 + $0x48] sm:$0xff] %v1398
      %1431 = vst [vmem:[#allocation2 + $0x50] sm:$0xff] %v1399
      %1432 = vst [vmem:[#allocation2 + $0x58] sm:$0xff] %v1400
      %1433 = vst [vmem:[#allocation2 + $0x60] sm:$0xff] %v1401
      %1434 = vst [vmem:[#allocation2 + $0x68] sm:$0xff] %v1402
      %1435 = vst [vmem:[#allocation2 + $0x70] sm:$0xff] %v1403
      %1436 = vst [vmem:[#allocation2 + $0x78] sm:$0xff] %v1404
      %1437 = vst [vmem:[#allocation2 + $0x80] sm:$0xff] %v1405
      %1438 = vst [vmem:[#allocation2 + $0x88] sm:$0xff] %v1406
      %1439 = vst [vmem:[#allocation2 + $0x90] sm:$0xff] %v1407
      %1440 = vst [vmem:[#allocation2 + $0x98] sm:$0xff] %v1408
      %1441 = vst [vmem:[#allocation2 + $0xa0] sm:$0xff] %v1409
      %1442 = vst [vmem:[#allocation2 + $0xa8] sm:$0xff] %v1410
      %1443 = vst [vmem:[#allocation2 + $0xb0] sm:$0xff] %v1411
      %1444 = vst [vmem:[#allocation2 + $0xb8] sm:$0xff] %v1412
      %1445 = vst [vmem:[#allocation2 + $0xc0] sm:$0xff] %v1413
      %1446 = vst [vmem:[#allocation2 + $0xc8] sm:$0xff] %v1414
      %1447 = vst [vmem:[#allocation2 + $0xd0] sm:$0xff] %v1415
      %1448 = vst [vmem:[#allocation2 + $0xd8] sm:$0xff] %v1416
      %1449 = vst [vmem:[#allocation2 + $0xe0] sm:$0xff] %v1417
      %1450 = vst [vmem:[#allocation2 + $0xe8] sm:$0xff] %v1418
      %1451 = vst [vmem:[#allocation2 + $0xf0] sm:$0xff] %v1419
      %1452 = vst [vmem:[#allocation2 + $0xf8] sm:$0xff] %v1420
      %v1453 = vld [vmem:[#allocation2] sm:$0xff]
      %v1454 = vld [vmem:[#allocation2 + $0x8] sm:$0xff]
      %v1455 = vld [vmem:[#allocation2 + $0x10] sm:$0xff]
      %v1456 = vld [vmem:[#allocation2 + $0x18] sm:$0xff]
      %v1457 = vld [vmem:[#allocation2 + $0x20] sm:$0xff]
      %v1458 = vld [vmem:[#allocation2 + $0x28] sm:$0xff]
      %v1459 = vld [vmem:[#allocation2 + $0x30] sm:$0xff]
      %v1460 = vld [vmem:[#allocation2 + $0x38] sm:$0xff]
      %v1461 = vld [vmem:[#allocation2 + $0x40] sm:$0xff]
      %v1462 = vld [vmem:[#allocation2 + $0x48] sm:$0xff]
      %v1463 = vld [vmem:[#allocation2 + $0x50] sm:$0xff]
      %v1464 = vld [vmem:[#allocation2 + $0x58] sm:$0xff]
      %v1465 = vld [vmem:[#allocation2 + $0x60] sm:$0xff]
      %v1466 = vld [vmem:[#allocation2 + $0x68] sm:$0xff]
      %v1467 = vld [vmem:[#allocation2 + $0x70] sm:$0xff]
      %v1468 = vld [vmem:[#allocation2 + $0x78] sm:$0xff]
      %v1469 = vld [vmem:[#allocation2 + $0x80] sm:$0xff]
      %v1470 = vld [vmem:[#allocation2 + $0x88] sm:$0xff]
      %v1471 = vld [vmem:[#allocation2 + $0x90] sm:$0xff]
      %v1472 = vld [vmem:[#allocation2 + $0x98] sm:$0xff]
      %v1473 = vld [vmem:[#allocation2 + $0xa0] sm:$0xff]
      %v1474 = vld [vmem:[#allocation2 + $0xa8] sm:$0xff]
      %v1475 = vld [vmem:[#allocation2 + $0xb0] sm:$0xff]
      %v1476 = vld [vmem:[#allocation2 + $0xb8] sm:$0xff]
      %v1477 = vld [vmem:[#allocation2 + $0xc0] sm:$0xff]
      %v1478 = vld [vmem:[#allocation2 + $0xc8] sm:$0xff]
      %v1479 = vld [vmem:[#allocation2 + $0xd0] sm:$0xff]
      %v1480 = vld [vmem:[#allocation2 + $0xd8] sm:$0xff]
      %v1481 = vld [vmem:[#allocation2 + $0xe0] sm:$0xff]
      %v1482 = vld [vmem:[#allocation2 + $0xe8] sm:$0xff]
      %v1483 = vld [vmem:[#allocation2 + $0xf0] sm:$0xff]
      %v1484 = vld [vmem:[#allocation2 + $0xf8] sm:$0xff]
      %v1485 = vpack.c.bf16 %v1454, %v1453
      %v1486 = vpack.c.bf16 %v1456, %v1455
      %v1487 = vpack.c.bf16 %v1458, %v1457
      %v1488 = vpack.c.bf16 %v1460, %v1459
      %v1489 = vpack.c.bf16 %v1462, %v1461
      %v1490 = vpack.c.bf16 %v1464, %v1463
      %v1491 = vpack.c.bf16 %v1466, %v1465
      %v1492 = vpack.c.bf16 %v1468, %v1467
      %v1493 = vpack.c.bf16 %v1470, %v1469
      %v1494 = vpack.c.bf16 %v1472, %v1471
      %v1495 = vpack.c.bf16 %v1474, %v1473
      %v1496 = vpack.c.bf16 %v1476, %v1475
      %v1497 = vpack.c.bf16 %v1478, %v1477
      %v1498 = vpack.c.bf16 %v1480, %v1479
      %v1499 = vpack.c.bf16 %v1482, %v1481
      %v1500 = vpack.c.bf16 %v1484, %v1483
      %v1517 = vunpack.c.l.b16 %v1485
      %v1518 = vunpack.c.h.b16 %v1485
      %v1519 = vunpack.c.l.b16 %v1486
      %v1520 = vunpack.c.h.b16 %v1486
      %v1521 = vunpack.c.l.b16 %v1487
      %v1522 = vunpack.c.h.b16 %v1487
      %v1523 = vunpack.c.l.b16 %v1488
      %v1524 = vunpack.c.h.b16 %v1488
      %v1525 = vunpack.c.l.b16 %v1489
      %v1526 = vunpack.c.h.b16 %v1489
      %v1527 = vunpack.c.l.b16 %v1490
      %v1528 = vunpack.c.h.b16 %v1490
      %v1529 = vunpack.c.l.b16 %v1491
      %v1530 = vunpack.c.h.b16 %v1491
      %v1531 = vunpack.c.l.b16 %v1492
      %v1532 = vunpack.c.h.b16 %v1492
      %v1533 = vunpack.c.l.b16 %v1493
      %v1534 = vunpack.c.h.b16 %v1493
      %v1535 = vunpack.c.l.b16 %v1494
      %v1536 = vunpack.c.h.b16 %v1494
      %v1537 = vunpack.c.l.b16 %v1495
      %v1538 = vunpack.c.h.b16 %v1495
      %v1539 = vunpack.c.l.b16 %v1496
      %v1540 = vunpack.c.h.b16 %v1496
      %v1541 = vunpack.c.l.b16 %v1497
      %v1542 = vunpack.c.h.b16 %v1497
      %v1543 = vunpack.c.l.b16 %v1498
      %v1544 = vunpack.c.h.b16 %v1498
      %v1545 = vunpack.c.l.b16 %v1499
      %v1546 = vunpack.c.h.b16 %v1499
      %v1547 = vunpack.c.l.b16 %v1500
      %v1548 = vunpack.c.h.b16 %v1500
      %v1549 = vpack.c.b16 %v1517, %v1517
      %v1550 = vpack.c.b16 %v1518, %v1518
      %v1551 = vpack.c.b16 %v1519, %v1519
      %v1552 = vpack.c.b16 %v1520, %v1520
      %v1553 = vpack.c.b16 %v1521, %v1521
      %v1554 = vpack.c.b16 %v1522, %v1522
      %v1555 = vpack.c.b16 %v1523, %v1523
      %v1556 = vpack.c.b16 %v1524, %v1524
      %v1557 = vpack.c.b16 %v1525, %v1525
      %v1558 = vpack.c.b16 %v1526, %v1526
      %v1559 = vpack.c.b16 %v1527, %v1527
      %v1560 = vpack.c.b16 %v1528, %v1528
      %v1561 = vpack.c.b16 %v1529, %v1529
      %v1562 = vpack.c.b16 %v1530, %v1530
      %v1563 = vpack.c.b16 %v1531, %v1531
      %v1564 = vpack.c.b16 %v1532, %v1532
      %v1565 = vpack.c.b16 %v1533, %v1533
      %v1566 = vpack.c.b16 %v1534, %v1534
      %v1567 = vpack.c.b16 %v1535, %v1535
      %v1568 = vpack.c.b16 %v1536, %v1536
      %v1569 = vpack.c.b16 %v1537, %v1537
      %v1570 = vpack.c.b16 %v1538, %v1538
      %v1571 = vpack.c.b16 %v1539, %v1539
      %v1572 = vpack.c.b16 %v1540, %v1540
      %v1573 = vpack.c.b16 %v1541, %v1541
      %v1574 = vpack.c.b16 %v1542, %v1542
      %v1575 = vpack.c.b16 %v1543, %v1543
      %v1576 = vpack.c.b16 %v1544, %v1544
      %v1577 = vpack.c.b16 %v1545, %v1545
      %v1578 = vpack.c.b16 %v1546, %v1546
      %v1579 = vpack.c.b16 %v1547, %v1547
      %v1580 = vpack.c.b16 %v1548, %v1548
      %1613 = vst [vmem:[%s196] sm:$0xf] %v1549
      %1614 = vst [vmem:[%s196 + $0x4] sm:$0xf] %v1550
      %1615 = vst [vmem:[%s196 + $0x8] sm:$0xf] %v1551
      %1616 = vst [vmem:[%s196 + $0xc] sm:$0xf] %v1552
      %1617 = vst [vmem:[%s196 + $0x10] sm:$0xf] %v1553
      %1618 = vst [vmem:[%s196 + $0x14] sm:$0xf] %v1554
      %1619 = vst [vmem:[%s196 + $0x18] sm:$0xf] %v1555
      %1620 = vst [vmem:[%s196 + $0x1c] sm:$0xf] %v1556
      %1621 = vst [vmem:[%s196 + $0x20] sm:$0xf] %v1557
      %1622 = vst [vmem:[%s196 + $0x24] sm:$0xf] %v1558
      %1623 = vst [vmem:[%s196 + $0x28] sm:$0xf] %v1559
      %1624 = vst [vmem:[%s196 + $0x2c] sm:$0xf] %v1560
      %1625 = vst [vmem:[%s196 + $0x30] sm:$0xf] %v1561
      %1626 = vst [vmem:[%s196 + $0x34] sm:$0xf] %v1562
      %1627 = vst [vmem:[%s196 + $0x38] sm:$0xf] %v1563
      %1628 = vst [vmem:[%s196 + $0x3c] sm:$0xf] %v1564
      %1629 = vst [vmem:[%s196 + $0x40] sm:$0xf] %v1565
      %1630 = vst [vmem:[%s196 + $0x44] sm:$0xf] %v1566
      %1631 = vst [vmem:[%s196 + $0x48] sm:$0xf] %v1567
      %1632 = vst [vmem:[%s196 + $0x4c] sm:$0xf] %v1568
      %1633 = vst [vmem:[%s196 + $0x50] sm:$0xf] %v1569
      %1634 = vst [vmem:[%s196 + $0x54] sm:$0xf] %v1570
      %1635 = vst [vmem:[%s196 + $0x58] sm:$0xf] %v1571
      %1636 = vst [vmem:[%s196 + $0x5c] sm:$0xf] %v1572
      %1637 = vst [vmem:[%s196 + $0x60] sm:$0xf] %v1573
      %1638 = vst [vmem:[%s196 + $0x64] sm:$0xf] %v1574
      %1639 = vst [vmem:[%s196 + $0x68] sm:$0xf] %v1575
      %1640 = vst [vmem:[%s196 + $0x6c] sm:$0xf] %v1576
      %1641 = vst [vmem:[%s196 + $0x70] sm:$0xf] %v1577
      %1642 = vst [vmem:[%s196 + $0x74] sm:$0xf] %v1578
      %1643 = vst [vmem:[%s196 + $0x78] sm:$0xf] %v1579
      %1644 = vst [vmem:[%s196 + $0x7c] sm:$0xf] %v1580
      %v1645 = vadd.f32 %v1453, %v1454
      %v1646 = vadd.f32 %v1645, %v1455
      %v1647 = vadd.f32 %v1646, %v1456
      %v1648 = vadd.f32 %v1647, %v1457
      %v1649 = vadd.f32 %v1648, %v1458
      %v1650 = vadd.f32 %v1649, %v1459
      %v1651 = vadd.f32 %v1650, %v1460
      %v1652 = vadd.f32 %v1651, %v1461
      %v1653 = vadd.f32 %v1652, %v1462
      %v1654 = vadd.f32 %v1653, %v1463
      %v1655 = vadd.f32 %v1654, %v1464
      %v1656 = vadd.f32 %v1655, %v1465
      %v1657 = vadd.f32 %v1656, %v1466
      %v1658 = vadd.f32 %v1657, %v1467
      %v1659 = vadd.f32 %v1658, %v1468
      %v1660 = vadd.f32 %v1659, %v1469
      %v1661 = vadd.f32 %v1660, %v1470
      %v1662 = vadd.f32 %v1661, %v1471
      %v1663 = vadd.f32 %v1662, %v1472
      %v1664 = vadd.f32 %v1663, %v1473
      %v1665 = vadd.f32 %v1664, %v1474
      %v1666 = vadd.f32 %v1665, %v1475
      %v1667 = vadd.f32 %v1666, %v1476
      %v1668 = vadd.f32 %v1667, %v1477
      %v1669 = vadd.f32 %v1668, %v1478
      %v1670 = vadd.f32 %v1669, %v1479
      %v1671 = vadd.f32 %v1670, %v1480
      %v1672 = vadd.f32 %v1671, %v1481
      %v1673 = vadd.f32 %v1672, %v1482
      %v1674 = vadd.f32 %v1673, %v1483
      %v1675 = vadd.f32 %v1674, %v1484
      %v1676 = vrot.slane %v1675, 4
      %v1677 = vadd.f32 %v1675, %v1676
      %v1678 = vrot.slane %v1677, 2
      %v1679 = vadd.f32 %v1677, %v1678
      %v1680 = vrot.slane %v1679, 1
      %v1681 = vadd.f32 %v1679, %v1680
      %1682 = vst [vmem:[%s202] sm:$0x1] %v1681
      %v1683 = vmul.f32 %v1453, %v1453
      %v1684 = vmul.f32 %v1454, %v1454
      %v1685 = vmul.f32 %v1455, %v1455
      %v1686 = vmul.f32 %v1456, %v1456
      %v1687 = vmul.f32 %v1457, %v1457
      %v1688 = vmul.f32 %v1458, %v1458
      %v1689 = vmul.f32 %v1459, %v1459
      %v1690 = vmul.f32 %v1460, %v1460
      %v1691 = vmul.f32 %v1461, %v1461
      %v1692 = vmul.f32 %v1462, %v1462
      %v1693 = vmul.f32 %v1463, %v1463
      %v1694 = vmul.f32 %v1464, %v1464
      %v1695 = vmul.f32 %v1465, %v1465
      %v1696 = vmul.f32 %v1466, %v1466
      %v1697 = vmul.f32 %v1467, %v1467
      %v1698 = vmul.f32 %v1468, %v1468
      %v1699 = vmul.f32 %v1469, %v1469
      %v1700 = vmul.f32 %v1470, %v1470
      %v1701 = vmul.f32 %v1471, %v1471
      %v1702 = vmul.f32 %v1472, %v1472
      %v1703 = vmul.f32 %v1473, %v1473
      %v1704 = vmul.f32 %v1474, %v1474
      %v1705 = vmul.f32 %v1475, %v1475
      %v1706 = vmul.f32 %v1476, %v1476
      %v1707 = vmul.f32 %v1477, %v1477
      %v1708 = vmul.f32 %v1478, %v1478
      %v1709 = vmul.f32 %v1479, %v1479
      %v1710 = vmul.f32 %v1480, %v1480
      %v1711 = vmul.f32 %v1481, %v1481
      %v1712 = vmul.f32 %v1482, %v1482
      %v1713 = vmul.f32 %v1483, %v1483
      %v1714 = vmul.f32 %v1484, %v1484
      %v1715 = vadd.f32 %v1683, %v1684
      %v1716 = vadd.f32 %v1715, %v1685
      %v1717 = vadd.f32 %v1716, %v1686
      %v1718 = vadd.f32 %v1717, %v1687
      %v1719 = vadd.f32 %v1718, %v1688
      %v1720 = vadd.f32 %v1719, %v1689
      %v1721 = vadd.f32 %v1720, %v1690
      %v1722 = vadd.f32 %v1721, %v1691
      %v1723 = vadd.f32 %v1722, %v1692
      %v1724 = vadd.f32 %v1723, %v1693
      %v1725 = vadd.f32 %v1724, %v1694
      %v1726 = vadd.f32 %v1725, %v1695
      %v1727 = vadd.f32 %v1726, %v1696
      %v1728 = vadd.f32 %v1727, %v1697
      %v1729 = vadd.f32 %v1728, %v1698
      %v1730 = vadd.f32 %v1729, %v1699
      %v1731 = vadd.f32 %v1730, %v1700
      %v1732 = vadd.f32 %v1731, %v1701
      %v1733 = vadd.f32 %v1732, %v1702
      %v1734 = vadd.f32 %v1733, %v1703
      %v1735 = vadd.f32 %v1734, %v1704
      %v1736 = vadd.f32 %v1735, %v1705
      %v1737 = vadd.f32 %v1736, %v1706
      %v1738 = vadd.f32 %v1737, %v1707
      %v1739 = vadd.f32 %v1738, %v1708
      %v1740 = vadd.f32 %v1739, %v1709
      %v1741 = vadd.f32 %v1740, %v1710
      %v1742 = vadd.f32 %v1741, %v1711
      %v1743 = vadd.f32 %v1742, %v1712
      %v1744 = vadd.f32 %v1743, %v1713
      %v1745 = vadd.f32 %v1744, %v1714
      %v1746 = vrot.slane %v1745, 4
      %v1747 = vadd.f32 %v1745, %v1746
      %v1748 = vrot.slane %v1747, 2
      %v1749 = vadd.f32 %v1747, %v1748
      %v1750 = vrot.slane %v1749, 1
      %v1751 = vadd.f32 %v1749, %v1750
      %1752 = vst [vmem:[%s202 + $0x1] sm:$0x1] %v1751
      %s1753 = sadd.s32 %s19, %s20
      %p1754 = scmp.lt.s32.totalorder %s1753, 1
      %s1755 = scalar_select %p1754, %s1753, 1
      %s1756 = smul.addr %s1755, 32
      %s1757 = smul.addr %s1756, 4
      %s1758 = scalar_lea.vmem %s2, %s1757
      %s1759 = sadd.s32 %s19, %s20
      %p1760 = scmp.lt.s32.totalorder %s1759, 1
      %s1761 = scalar_select %p1760, %s1759, 1
      %s1762 = smul.addr %s1761, 2
      %s1763 = scalar_lea.vmem %s3, %s1762
      // Predicated region
      $region29: #{conv_bn_relu.2} parent=27 // pred_check
        %p1764 = pneg %p94
      $region30: #{conv_bn_relu.2} parent=27 // pred_check_branch
        %1766 = sbr.rel (%p1764) target = $region32
      $region31: #{conv_bn_relu.2} parent=27 // pred_region
        %s1767 = sadd.s32 %s19, %s20
      $region32: #{conv_bn_relu.2} parent=27 // pred_fallthru
        _
      // Predicated region
      $region33: #{conv_bn_relu.2} parent=27 // pred_check
        %p1768 = pneg %p122
      $region34: #{conv_bn_relu.2} parent=27 // pred_check_branch
        %1770 = sbr.rel (%p1768) target = $region36
      $region35: #{conv_bn_relu.2} parent=27 // pred_region
        %s1771 = sadd.s32 %s19, %s20
      $region36: #{conv_bn_relu.2} parent=27 // pred_fallthru
        _
    $region28: #{conv_bn_relu.2} parent=5 // pred_fallthru
      _
    %p1772 = scmp.le.s32.totalorder 2, %s10
    // Predicated region
    $region37: #{conv_bn_relu.2} parent=5 // pred_check
      %p1773 = pneg %p1772
    $region38: #{conv_bn_relu.2} parent=5 // pred_check_branch
      %1775 = sbr.rel (%p1773) target = $region40
    $region39: #{conv_bn_relu.2} parent=5 // pred_region
      %s1776 = ssub.s32 %s10, 2
      // Predicated region
      $region41: #{conv_bn_relu.2} parent=39 // pred_check
        %p1777 = pneg %p100
      $region42: #{conv_bn_relu.2} parent=39 // pred_check_branch
        %1779 = sbr.rel (%p1777) target = $region44
      $region43: #{conv_bn_relu.2} parent=39 // pred_region
        %s1780 = sadd.s32 %s21, %s22
        %p1781 = scmp.lt.s32.totalorder %s1780, 1
        %s1782 = scalar_select %p1781, %s1780, 1
        %s1783 = smul.addr %s1782, 32
        %s1784 = smul.addr %s1783, 4
        %s1785 = scalar_lea.vmem %s2, %s1784
      $region44: #{conv_bn_relu.2} parent=39 // pred_fallthru
        _
      // Predicated region
      $region45: #{conv_bn_relu.2} parent=39 // pred_check
        %p1786 = pneg %p128
      $region46: #{conv_bn_relu.2} parent=39 // pred_check_branch
        %1788 = sbr.rel (%p1786) target = $region48
      $region47: #{conv_bn_relu.2} parent=39 // pred_region
        %s1789 = sadd.s32 %s21, %s22
        %p1790 = scmp.lt.s32.totalorder %s1789, 1
        %s1791 = scalar_select %p1790, %s1789, 1
        %s1792 = smul.addr %s1791, 2
        %s1793 = scalar_lea.vmem %s3, %s1792
      $region48: #{conv_bn_relu.2} parent=39 // pred_fallthru
        _
    $region40: #{conv_bn_relu.2} parent=5 // pred_fallthru
      _
  $region6: #{conv_bn_relu.2} parent=0 // loop_footer
    %s14 = sadd.s32 1, %s10
  $region7: #{conv_bn_relu.2} parent=0 // loop_footer_branch
    %9 = sbr.rel target = $region3
  $region8: #{conv_bn_relu.2} parent=0 // loop_exit
    _

</llo_original>
